<compile_context>
chip_gen: v7x
topology: tpu7x:2x2x1
jax: 0.10.0
libtpu: 0.0.40
codegen_flags: <defaults>
</compile_context>

<pallas_src>
import math
import functools

import jax
import jax.numpy as jnp
from jax import lax
from jax.experimental import pallas as pl
from jax.experimental.pallas import tpu as pltpu

_LN_EPS = 1e-5


def _layer_norm(x, gamma, beta):
    mean = jnp.mean(x, axis=-1, keepdims=True)
    centered = x - mean
    var = jnp.mean(centered * centered, axis=-1, keepdims=True)
    inv = lax.rsqrt(var + _LN_EPS)
    return centered * inv * gamma + beta


def _gelu_tanh(x):
    # TODO(synk): PyTorch nn.GELU() default is exact erf; tanh approximation differs by <~1e-3.
    c = math.sqrt(2.0 / math.pi)
    return 0.5 * x * (1.0 + jnp.tanh(c * (x + 0.044715 * x * x * x)))


def _encoder_kernel(x_ref, ln1_g_ref, ln1_b_ref, wqkv_ref, bqkv_ref,
                    wo_ref, bo_ref, ln2_g_ref, ln2_b_ref,
                    w1_ref, b1_ref, w2_ref, b2_ref, o_ref,
                    qh_ref, kh_ref, vh_ref, ctx_ref,
                    *, n_heads, d_k, d_model):
    f32 = jnp.float32
    bf16 = jnp.bfloat16
    D = d_model

    x = x_ref[0].astype(f32)                                        # (S, D)

    # ---- LayerNorm 1 (f32, VPU/EUP) ----
    ln1 = _layer_norm(x, ln1_g_ref[...], ln1_b_ref[...])

    # ---- fused QKV projection: one (S,D)@(D,3D) bf16 MXU matmul, f32 accumulate.
    # The 1/sqrt(d_k) attention scale is pre-folded into the Q columns of wqkv/bqkv.
    qkv = jnp.dot(ln1.astype(bf16), wqkv_ref[...],
                  preferred_element_type=f32) + bqkv_ref[...]       # (S, 3D) f32

    # ---- relayout to head-major scratch using STATIC lane slices only, so the head
    #      loop below needs nothing but leading-dim dynamic indexing.
    for h in range(n_heads):                                        # slices only, tiny live range
        lo = h * d_k
        qh_ref[h] = qkv[:, lo:lo + d_k].astype(bf16)
        kh_ref[h] = qkv[:, D + lo:D + lo + d_k].astype(bf16)
        vh_ref[h] = qkv[:, 2 * D + lo:2 * D + lo + d_k].astype(bf16)

    # ---- attention: fori_loop over heads (live ranges bounded to one head's working set)
    def head_body(h, carry):
        qh = qh_ref[h]                                              # (S, d_k) bf16
        kh = kh_ref[h]
        vh = vh_ref[h]
        # contract last dims of both operands -> no explicit K transpose in the kernel
        # (intended to hit the transposed-RHS MXU path; check pl.lower_as_mlir for vxpose).
        s = lax.dot_general(qh, kh, (((1,), (1,)), ((), ())),
                            preferred_element_type=f32)             # (S, S) f32
        s = s - jnp.max(s, axis=-1, keepdims=True)                  # stable softmax
        p = jnp.exp(s)
        denom = jnp.sum(p, axis=-1, keepdims=True)                  # (S, 1) f32
        # PV with UNnormalised probabilities; normalise the (S,d_k) context afterwards
        # instead of the (S,S) matrix (S/d_k fewer VALU ops).  EUP reciprocal ~free.
        ctx = jnp.dot(p.astype(bf16), vh, preferred_element_type=f32)   # (S, d_k) f32
        ctx = ctx * pl.reciprocal(denom, approx=True)
        ctx_ref[h] = ctx.astype(bf16)
        return carry

    lax.fori_loop(0, n_heads, head_body, 0)

    # ---- "concat + W_o" fused into ONE (S,D)@(D,D) MXU matmul (full K = D depth).
    concat = jnp.concatenate([ctx_ref[h] for h in range(n_heads)], axis=-1)   # (S, D) bf16
    attn = jnp.dot(concat, wo_ref[...], preferred_element_type=f32) + bo_ref[...]

    # ---- residual 1 ----
    h1 = x + attn

    # ---- LayerNorm 2 + MLP (GELU) ----
    ln2 = _layer_norm(h1, ln2_g_ref[...], ln2_b_ref[...])
    hid = jnp.dot(ln2.astype(bf16), w1_ref[...],
                  preferred_element_type=f32) + b1_ref[...]         # (S, 4D) f32
    hid = _gelu_tanh(hid).astype(bf16)                              # drop to bf16 right away
    # TODO(synk): for very long S, tile the MLP over row chunks to shrink the (S,4D) buffer.
    ff = jnp.dot(hid, w2_ref[...], preferred_element_type=f32) + b2_ref[...]  # (S, D)

    # ---- residual 2 ----
    o_ref[0] = (h1 + ff).astype(o_ref.dtype)


def _vmem_limit_bytes(S, D, d_ff, n_heads):
    """Per-generation VMEM budget derived from the actual buffer sizes, capped at ~75% of
    the chip's physical VMEM (128 MiB on v5e/v6e, 64 MiB on v7x)."""
    d_k = D // n_heads
    bf16, f32 = 2, 4
    w = bf16 * (3 * D * D + D * D + D * d_ff + d_ff * D)            # packed bf16 matrices
    vecs = f32 * (3 * D + 6 * D + d_ff)                             # biases + LN params
    io = 2 * 2 * S * D * f32                                        # x + out, double-buffered
    scratch = 4 * n_heads * S * d_k * bf16                          # head-major q/k/v/ctx
    act = f32 * (S * 3 * D + S * S + S * d_ff + 3 * S * D) + bf16 * (S * d_ff + S * D)
    need = 2 * w + vecs + io + scratch + act + (8 << 20)            # 2x weights (auto-pipeline) + headroom
    try:
        cap = int(pltpu.get_tpu_info().vmem_capacity_bytes)
    except Exception:                                               # fallback: smallest real VMEM (v7x)
        cap = 64 << 20
    return int(min(max(need, 32 << 20), (cap * 3) // 4))


def encoder_forward(x, params, *, n_heads):
    """x: (B, S, d_model) float32. params: dict from init_params (bf16 matrices, f32 vectors)."""
    B, S, D = x.shape
    assert D % n_heads == 0
    d_k = D // n_heads
    d_ff = params["w1"].shape[1]

    kernel = functools.partial(_encoder_kernel, n_heads=n_heads, d_k=d_k, d_model=D)

    def full(shape):
        return pl.BlockSpec(shape, lambda b, _s=shape: (0,) * len(_s))

    # advisory cost estimate (matmul flops dominate)
    flops = B * (24 * S * D * D + 4 * S * S * D)
    transcendentals = B * (n_heads * S * S + S * d_ff + n_heads * S + 2 * S)
    weight_bytes = (3 * D * D + D * D + D * d_ff + d_ff * D) * 2 + (3 * D + 6 * D + d_ff) * 4
    bytes_accessed = 2 * B * S * D * 4 + weight_bytes

    return pl.pallas_call(
        kernel,
        out_shape=jax.ShapeDtypeStruct((B, S, D), x.dtype),
        grid_spec=pltpu.PrefetchScalarGridSpec(
            num_scalar_prefetch=0,
            grid=(B,),
            in_specs=[
                pl.BlockSpec((1, S, D), lambda b: (b, 0, 0)),       # x
                full((1, D)), full((1, D)),                         # ln1 gamma / beta
                full((D, 3 * D)), full((1, 3 * D)),                 # Wqkv (bf16, q-scale folded), bqkv
                full((D, D)), full((1, D)),                         # Wo (bf16), bo
                full((1, D)), full((1, D)),                         # ln2 gamma / beta
                full((D, d_ff)), full((1, d_ff)),                   # W1 (bf16), b1
                full((d_ff, D)), full((1, D)),                      # W2 (bf16), b2
            ],
            out_specs=pl.BlockSpec((1, S, D), lambda b: (b, 0, 0)),
            scratch_shapes=[
                pltpu.VMEM((n_heads, S, d_k), jnp.bfloat16),        # Q  (head-major)
                pltpu.VMEM((n_heads, S, d_k), jnp.bfloat16),        # K
                pltpu.VMEM((n_heads, S, d_k), jnp.bfloat16),        # V
                pltpu.VMEM((n_heads, S, d_k), jnp.bfloat16),        # per-head context
            ],
        ),
        compiler_params=pltpu.CompilerParams(
            dimension_semantics=("parallel",),
            vmem_limit_bytes=_vmem_limit_bytes(S, D, d_ff, n_heads)),
        cost_estimate=pl.CostEstimate(flops=flops,
                                      transcendentals=transcendentals,
                                      bytes_accessed=bytes_accessed),
    )(x, params["ln1_g"], params["ln1_b"], params["wqkv"], params["bqkv"],
      params["wo"], params["bo"], params["ln2_g"], params["ln2_b"],
      params["w1"], params["b1"], params["w2"], params["b2"])


def init_params(key, d_model, n_heads, r_mlp=4):
    """Deterministic init matching the PyTorch module layout.
    Per-head Q/K/V linears are packed column-wise into one (D, 3D) matrix (head order
    matches torch.cat(..., dim=-1)); the 1/sqrt(d_k) attention scale is folded into the
    Q columns/bias.  Matrices stored bf16, vectors/biases f32."""
    d_k = d_model // n_heads
    d_ff = d_model * r_mlp
    ks = jax.random.split(key, 16)
    f32, bf16 = jnp.float32, jnp.bfloat16

    def uni(k, shape, bound):
        return jax.random.uniform(k, shape, minval=-bound, maxval=bound, dtype=f32)

    bound_in = 1.0 / math.sqrt(d_model)

    def pack_heads(kw, kb, scale=1.0):
        # per-head torch nn.Linear(d_model, d_k): weight (d_k, d_model), y = x @ W.T + b
        w = uni(kw, (n_heads, d_k, d_model), bound_in) * scale
        b = uni(kb, (n_heads, d_k), bound_in) * scale
        w_packed = jnp.transpose(w, (2, 0, 1)).reshape(d_model, n_heads * d_k)
        b_packed = b.reshape(1, n_heads * d_k)
        return w_packed, b_packed

    q_scale = 1.0 / math.sqrt(d_k)                                   # folded at init (free)
    wq, bq = pack_heads(ks[0], ks[1], q_scale)
    wk, bk = pack_heads(ks[2], ks[3])
    wv, bv = pack_heads(ks[4], ks[5])
    wqkv = jnp.concatenate([wq, wk, wv], axis=1).astype(bf16)        # (D, 3D)
    bqkv = jnp.concatenate([bq, bk, bv], axis=1)                     # (1, 3D) f32

    wo = uni(ks[6], (d_model, d_model), bound_in).T.astype(bf16)     # torch (out,in) -> (in,out)
    bo = uni(ks[7], (1, d_model), bound_in)

    w1 = uni(ks[8], (d_ff, d_model), bound_in).T.astype(bf16)        # (D, 4D)
    b1 = uni(ks[9], (1, d_ff), bound_in)
    bound_ff = 1.0 / math.sqrt(d_ff)
    w2 = uni(ks[10], (d_model, d_ff), bound_ff).T.astype(bf16)       # (4D, D)
    b2 = uni(ks[11], (1, d_model), bound_ff)

    ln1_g = 1.0 + 0.1 * jax.random.normal(ks[12], (1, d_model), dtype=f32)
    ln1_b = 0.1 * jax.random.normal(ks[13], (1, d_model), dtype=f32)
    ln2_g = 1.0 + 0.1 * jax.random.normal(ks[14], (1, d_model), dtype=f32)
    ln2_b = 0.1 * jax.random.normal(ks[15], (1, d_model), dtype=f32)

    return dict(ln1_g=ln1_g, ln1_b=ln1_b, wqkv=wqkv, bqkv=bqkv, wo=wo, bo=bo,
                ln2_g=ln2_g, ln2_b=ln2_b, w1=w1, b1=b1, w2=w2, b2=b2)


def reference_encoder(x, params, *, n_heads):
    """Pure-JAX f32 reference matching the PyTorch Encoder (eval mode, exact-erf GELU).
    NOTE: the 1/sqrt(d_k) scale is pre-folded into the Q columns of wqkv, so no explicit
    division appears here — mathematically identical to the PyTorch forward."""
    D = x.shape[-1]
    d_k = D // n_heads
    asf = lambda a: a.astype(jnp.float32)

    def ln(v, g, b):
        m = jnp.mean(v, axis=-1, keepdims=True)
        var = jnp.mean((v - m) ** 2, axis=-1, keepdims=True)
        return (v - m) / jnp.sqrt(var + _LN_EPS) * g + b

    x1 = ln(x, params["ln1_g"], params["ln1_b"])
    qkv = x1 @ asf(params["wqkv"]) + params["bqkv"]
    q, k, v = qkv[..., :D], qkv[..., D:2 * D], qkv[..., 2 * D:]
    outs = []
    for h in range(n_heads):
        lo, hi = h * d_k, (h + 1) * d_k
        s = jnp.einsum("bqd,bkd->bqk", q[..., lo:hi], k[..., lo:hi])
        p = jax.nn.softmax(s, axis=-1)
        outs.append(jnp.einsum("bqk,bkd->bqd", p, v[..., lo:hi]))
    attn = jnp.concatenate(outs, axis=-1) @ asf(params["wo"]) + params["bo"]
    h1 = x + attn
    x2 = ln(h1, params["ln2_g"], params["ln2_b"])
    hid = jax.nn.gelu(x2 @ asf(params["w1"]) + params["b1"], approximate=False)
    ff = hid @ asf(params["w2"]) + params["b2"]
    return h1 + ff


if __name__ == "__main__":
    # NOTE: small smoke-test shapes; tune/benchmark at realistic ViT shapes (D>=768, S>=196).
    B, S, d_model, n_heads = 2, 8, 32, 4

    key = jax.random.PRNGKey(0)
    kx, kp = jax.random.split(key)
    x = jax.random.normal(kx, (B, S, d_model), dtype=jnp.float32)
    params = init_params(kp, d_model, n_heads)

    out = encoder_forward(x, params, n_heads=n_heads)
    out = jax.block_until_ready(out)

    ref = reference_encoder(x, params, n_heads=n_heads)
    assert out.shape == (B, S, d_model)
    # bf16 matmul operands (f32 accumulation), tanh-GELU and approx reciprocal in the
    # softmax denominator -> loosened tolerance vs. the exact f32 reference.
    max_diff = float(jnp.max(jnp.abs(out - ref)))
    assert jnp.allclose(out, ref, atol=5e-2, rtol=5e-2), \
        f"mismatch vs. reference (max abs diff {max_diff})"

    print("KERNEL_OK")
</pallas_src>

<mosaic_0001>
module attributes {stable_mosaic.version = 11 : i64} {
  func.func @_encoder_kernel(%arg0: i32, %arg1: memref<1x8x32xf32, #tpu.memory_space<vmem>>, %arg2: memref<1x32xf32, #tpu.memory_space<vmem>>, %arg3: memref<1x32xf32, #tpu.memory_space<vmem>>, %arg4: memref<32x96xbf16, #tpu.memory_space<vmem>>, %arg5: memref<1x96xf32, #tpu.memory_space<vmem>>, %arg6: memref<32x32xbf16, #tpu.memory_space<vmem>>, %arg7: memref<1x32xf32, #tpu.memory_space<vmem>>, %arg8: memref<1x32xf32, #tpu.memory_space<vmem>>, %arg9: memref<1x32xf32, #tpu.memory_space<vmem>>, %arg10: memref<32x128xbf16, #tpu.memory_space<vmem>>, %arg11: memref<1x128xf32, #tpu.memory_space<vmem>>, %arg12: memref<128x32xbf16, #tpu.memory_space<vmem>>, %arg13: memref<1x32xf32, #tpu.memory_space<vmem>>, %arg14: memref<1x8x32xf32, #tpu.memory_space<vmem>>, %arg15: memref<4x8x8xbf16, #tpu.memory_space<vmem>>, %arg16: memref<4x8x8xbf16, #tpu.memory_space<vmem>>, %arg17: memref<4x8x8xbf16, #tpu.memory_space<vmem>>, %arg18: memref<4x8x8xbf16, #tpu.memory_space<vmem>>) attributes {dimension_semantics = [#tpu.dimension_semantics<parallel>], iteration_bounds = array<i64: 2>, scalar_prefetch = 0 : i64, scratch_operands = 4 : i64, tpu.core_type = #tpu.core_type<tc>, window_params = [{transform_indices = @transform_0, window_bounds = array<i64: 1, 8, 32>}, {pipeline_mode = #tpu.pipeline_mode<synchronous>, transform_indices = @transform_1, window_bounds = array<i64: 1, 32>}, {pipeline_mode = #tpu.pipeline_mode<synchronous>, transform_indices = @transform_2, window_bounds = array<i64: 1, 32>}, {pipeline_mode = #tpu.pipeline_mode<synchronous>, transform_indices = @transform_3, window_bounds = array<i64: 32, 96>}, {pipeline_mode = #tpu.pipeline_mode<synchronous>, transform_indices = @transform_4, window_bounds = array<i64: 1, 96>}, {pipeline_mode = #tpu.pipeline_mode<synchronous>, transform_indices = @transform_5, window_bounds = array<i64: 32, 32>}, {pipeline_mode = #tpu.pipeline_mode<synchronous>, transform_indices = @transform_6, window_bounds = array<i64: 1, 32>}, {pipeline_mode = #tpu.pipeline_mode<synchronous>, transform_indices = @transform_7, window_bounds = array<i64: 1, 32>}, {pipeline_mode = #tpu.pipeline_mode<synchronous>, transform_indices = @transform_8, window_bounds = array<i64: 1, 32>}, {pipeline_mode = #tpu.pipeline_mode<synchronous>, transform_indices = @transform_9, window_bounds = array<i64: 32, 128>}, {pipeline_mode = #tpu.pipeline_mode<synchronous>, transform_indices = @transform_10, window_bounds = array<i64: 1, 128>}, {pipeline_mode = #tpu.pipeline_mode<synchronous>, transform_indices = @transform_11, window_bounds = array<i64: 128, 32>}, {pipeline_mode = #tpu.pipeline_mode<synchronous>, transform_indices = @transform_12, window_bounds = array<i64: 1, 32>}, {transform_indices = @transform_13, window_bounds = array<i64: 1, 8, 32>}]} {
    %c0 = arith.constant 0 : index
    %c0_0 = arith.constant 0 : index
    %c0_1 = arith.constant 0 : index
    %0 = vector.load %arg1[%c0, %c0_0, %c0_1] : memref<1x8x32xf32, #tpu.memory_space<vmem>>, vector<1x8x32xf32>
    %1 = vector.shape_cast %0 : vector<1x8x32xf32> to vector<8x32xf32>
    %c0_2 = arith.constant 0 : index
    %c0_3 = arith.constant 0 : index
    %2 = vector.load %arg2[%c0_2, %c0_3] : memref<1x32xf32, #tpu.memory_space<vmem>>, vector<1x32xf32>
    %c0_4 = arith.constant 0 : index
    %c0_5 = arith.constant 0 : index
    %3 = vector.load %arg3[%c0_4, %c0_5] : memref<1x32xf32, #tpu.memory_space<vmem>>, vector<1x32xf32>
    %cst = arith.constant dense<0.000000e+00> : vector<8xf32>
    %4 = vector.multi_reduction <add>, %1, %cst [1] : vector<8x32xf32> to vector<8xf32>
    %5 = vector.shape_cast %4 : vector<8xf32> to vector<8x1xf32>
    %cst_6 = arith.constant 3.200000e+01 : f32
    %6 = vector.broadcast %cst_6 : f32 to vector<8x1xf32>
    %7 = arith.divf %5, %6 : vector<8x1xf32>
    %8 = vector.broadcast %7 : vector<8x1xf32> to vector<8x32xf32>
    %9 = arith.subf %1, %8 : vector<8x32xf32>
    %10 = arith.mulf %9, %9 : vector<8x32xf32>
    %cst_7 = arith.constant dense<0.000000e+00> : vector<8xf32>
    %11 = vector.multi_reduction <add>, %10, %cst_7 [1] : vector<8x32xf32> to vector<8xf32>
    %12 = vector.shape_cast %11 : vector<8xf32> to vector<8x1xf32>
    %cst_8 = arith.constant 3.200000e+01 : f32
    %13 = vector.broadcast %cst_8 : f32 to vector<8x1xf32>
    %14 = arith.divf %12, %13 : vector<8x1xf32>
    %cst_9 = arith.constant 9.99999974E-6 : f32
    %15 = vector.broadcast %cst_9 : f32 to vector<8x1xf32>
    %16 = arith.addf %14, %15 : vector<8x1xf32>
    %17 = math.rsqrt %16 : vector<8x1xf32>
    %18 = vector.broadcast %17 : vector<8x1xf32> to vector<8x32xf32>
    %19 = arith.mulf %9, %18 : vector<8x32xf32>
    %20 = vector.broadcast %2 : vector<1x32xf32> to vector<8x32xf32>
    %21 = arith.mulf %19, %20 : vector<8x32xf32>
    %22 = vector.broadcast %3 : vector<1x32xf32> to vector<8x32xf32>
    %23 = arith.addf %21, %22 : vector<8x32xf32>
    %24 = arith.truncf %23 : vector<8x32xf32> to vector<8x32xbf16>
    %c0_10 = arith.constant 0 : index
    %c0_11 = arith.constant 0 : index
    %25 = vector.load %arg4[%c0_10, %c0_11] : memref<32x96xbf16, #tpu.memory_space<vmem>>, vector<32x96xbf16>
    %cst_12 = arith.constant dense<0.000000e+00> : vector<8x96xf32>
    %26 = tpu.matmul %24, %25, %cst_12 {dimension_numbers = #tpu.dot_dimension_numbers<[1], [0], [0], [1], [0, 0, 1, 1], [], []>} : vector<8x32xbf16>, vector<32x96xbf16>, vector<8x96xf32> -> vector<8x96xf32>
    %c0_13 = arith.constant 0 : index
    %c0_14 = arith.constant 0 : index
    %27 = vector.load %arg5[%c0_13, %c0_14] : memref<1x96xf32, #tpu.memory_space<vmem>>, vector<1x96xf32>
    %28 = vector.broadcast %27 : vector<1x96xf32> to vector<8x96xf32>
    %29 = arith.addf %26, %28 : vector<8x96xf32>
    %30 = vector.extract_strided_slice %29 {offsets = [0, 0], sizes = [8, 8], strides = [1, 1]} : vector<8x96xf32> to vector<8x8xf32>
    %31 = arith.truncf %30 : vector<8x8xf32> to vector<8x8xbf16>
    %c0_15 = arith.constant 0 : index
    %c0_16 = arith.constant 0 : index
    %c0_17 = arith.constant 0 : index
    %32 = vector.load %arg15[%c0_15, %c0_16, %c0_17] : memref<4x8x8xbf16, #tpu.memory_space<vmem>>, vector<1x8x8xbf16>
    %33 = vector.shape_cast %32 : vector<1x8x8xbf16> to vector<8x8xbf16>
    %34 = vector.shape_cast %31 : vector<8x8xbf16> to vector<1x8x8xbf16>
    tpu.vector_store %arg15[%c0_15, %c0_16, %c0_17], %34 {strides = array<i32>} : memref<4x8x8xbf16, #tpu.memory_space<vmem>>, vector<1x8x8xbf16>,
    %35 = vector.extract_strided_slice %29 {offsets = [0, 32], sizes = [8, 8], strides = [1, 1]} : vector<8x96xf32> to vector<8x8xf32>
    %36 = arith.truncf %35 : vector<8x8xf32> to vector<8x8xbf16>
    %c0_18 = arith.constant 0 : index
    %c0_19 = arith.constant 0 : index
    %c0_20 = arith.constant 0 : index
    %37 = vector.load %arg16[%c0_18, %c0_19, %c0_20] : memref<4x8x8xbf16, #tpu.memory_space<vmem>>, vector<1x8x8xbf16>
    %38 = vector.shape_cast %37 : vector<1x8x8xbf16> to vector<8x8xbf16>
    %39 = vector.shape_cast %36 : vector<8x8xbf16> to vector<1x8x8xbf16>
    tpu.vector_store %arg16[%c0_18, %c0_19, %c0_20], %39 {strides = array<i32>} : memref<4x8x8xbf16, #tpu.memory_space<vmem>>, vector<1x8x8xbf16>,
    %40 = vector.extract_strided_slice %29 {offsets = [0, 64], sizes = [8, 8], strides = [1, 1]} : vector<8x96xf32> to vector<8x8xf32>
    %41 = arith.truncf %40 : vector<8x8xf32> to vector<8x8xbf16>
    %c0_21 = arith.constant 0 : index
    %c0_22 = arith.constant 0 : index
    %c0_23 = arith.constant 0 : index
    %42 = vector.load %arg17[%c0_21, %c0_22, %c0_23] : memref<4x8x8xbf16, #tpu.memory_space<vmem>>, vector<1x8x8xbf16>
    %43 = vector.shape_cast %42 : vector<1x8x8xbf16> to vector<8x8xbf16>
    %44 = vector.shape_cast %41 : vector<8x8xbf16> to vector<1x8x8xbf16>
    tpu.vector_store %arg17[%c0_21, %c0_22, %c0_23], %44 {strides = array<i32>} : memref<4x8x8xbf16, #tpu.memory_space<vmem>>, vector<1x8x8xbf16>,
    %45 = vector.extract_strided_slice %29 {offsets = [0, 8], sizes = [8, 8], strides = [1, 1]} : vector<8x96xf32> to vector<8x8xf32>
    %46 = arith.truncf %45 : vector<8x8xf32> to vector<8x8xbf16>
    %c1 = arith.constant 1 : index
    %c0_24 = arith.constant 0 : index
    %c0_25 = arith.constant 0 : index
    %47 = vector.load %arg15[%c1, %c0_24, %c0_25] : memref<4x8x8xbf16, #tpu.memory_space<vmem>>, vector<1x8x8xbf16>
    %48 = vector.shape_cast %47 : vector<1x8x8xbf16> to vector<8x8xbf16>
    %49 = vector.shape_cast %46 : vector<8x8xbf16> to vector<1x8x8xbf16>
    tpu.vector_store %arg15[%c1, %c0_24, %c0_25], %49 {strides = array<i32>} : memref<4x8x8xbf16, #tpu.memory_space<vmem>>, vector<1x8x8xbf16>,
    %50 = vector.extract_strided_slice %29 {offsets = [0, 40], sizes = [8, 8], strides = [1, 1]} : vector<8x96xf32> to vector<8x8xf32>
    %51 = arith.truncf %50 : vector<8x8xf32> to vector<8x8xbf16>
    %c1_26 = arith.constant 1 : index
    %c0_27 = arith.constant 0 : index
    %c0_28 = arith.constant 0 : index
    %52 = vector.load %arg16[%c1_26, %c0_27, %c0_28] : memref<4x8x8xbf16, #tpu.memory_space<vmem>>, vector<1x8x8xbf16>
    %53 = vector.shape_cast %52 : vector<1x8x8xbf16> to vector<8x8xbf16>
    %54 = vector.shape_cast %51 : vector<8x8xbf16> to vector<1x8x8xbf16>
    tpu.vector_store %arg16[%c1_26, %c0_27, %c0_28], %54 {strides = array<i32>} : memref<4x8x8xbf16, #tpu.memory_space<vmem>>, vector<1x8x8xbf16>,
    %55 = vector.extract_strided_slice %29 {offsets = [0, 72], sizes = [8, 8], strides = [1, 1]} : vector<8x96xf32> to vector<8x8xf32>
    %56 = arith.truncf %55 : vector<8x8xf32> to vector<8x8xbf16>
    %c1_29 = arith.constant 1 : index
    %c0_30 = arith.constant 0 : index
    %c0_31 = arith.constant 0 : index
    %57 = vector.load %arg17[%c1_29, %c0_30, %c0_31] : memref<4x8x8xbf16, #tpu.memory_space<vmem>>, vector<1x8x8xbf16>
    %58 = vector.shape_cast %57 : vector<1x8x8xbf16> to vector<8x8xbf16>
    %59 = vector.shape_cast %56 : vector<8x8xbf16> to vector<1x8x8xbf16>
    tpu.vector_store %arg17[%c1_29, %c0_30, %c0_31], %59 {strides = array<i32>} : memref<4x8x8xbf16, #tpu.memory_space<vmem>>, vector<1x8x8xbf16>,
    %60 = vector.extract_strided_slice %29 {offsets = [0, 16], sizes = [8, 8], strides = [1, 1]} : vector<8x96xf32> to vector<8x8xf32>
    %61 = arith.truncf %60 : vector<8x8xf32> to vector<8x8xbf16>
    %c2 = arith.constant 2 : index
    %c0_32 = arith.constant 0 : index
    %c0_33 = arith.constant 0 : index
    %62 = vector.load %arg15[%c2, %c0_32, %c0_33] : memref<4x8x8xbf16, #tpu.memory_space<vmem>>, vector<1x8x8xbf16>
    %63 = vector.shape_cast %62 : vector<1x8x8xbf16> to vector<8x8xbf16>
    %64 = vector.shape_cast %61 : vector<8x8xbf16> to vector<1x8x8xbf16>
    tpu.vector_store %arg15[%c2, %c0_32, %c0_33], %64 {strides = array<i32>} : memref<4x8x8xbf16, #tpu.memory_space<vmem>>, vector<1x8x8xbf16>,
    %65 = vector.extract_strided_slice %29 {offsets = [0, 48], sizes = [8, 8], strides = [1, 1]} : vector<8x96xf32> to vector<8x8xf32>
    %66 = arith.truncf %65 : vector<8x8xf32> to vector<8x8xbf16>
    %c2_34 = arith.constant 2 : index
    %c0_35 = arith.constant 0 : index
    %c0_36 = arith.constant 0 : index
    %67 = vector.load %arg16[%c2_34, %c0_35, %c0_36] : memref<4x8x8xbf16, #tpu.memory_space<vmem>>, vector<1x8x8xbf16>
    %68 = vector.shape_cast %67 : vector<1x8x8xbf16> to vector<8x8xbf16>
    %69 = vector.shape_cast %66 : vector<8x8xbf16> to vector<1x8x8xbf16>
    tpu.vector_store %arg16[%c2_34, %c0_35, %c0_36], %69 {strides = array<i32>} : memref<4x8x8xbf16, #tpu.memory_space<vmem>>, vector<1x8x8xbf16>,
    %70 = vector.extract_strided_slice %29 {offsets = [0, 80], sizes = [8, 8], strides = [1, 1]} : vector<8x96xf32> to vector<8x8xf32>
    %71 = arith.truncf %70 : vector<8x8xf32> to vector<8x8xbf16>
    %c2_37 = arith.constant 2 : index
    %c0_38 = arith.constant 0 : index
    %c0_39 = arith.constant 0 : index
    %72 = vector.load %arg17[%c2_37, %c0_38, %c0_39] : memref<4x8x8xbf16, #tpu.memory_space<vmem>>, vector<1x8x8xbf16>
    %73 = vector.shape_cast %72 : vector<1x8x8xbf16> to vector<8x8xbf16>
    %74 = vector.shape_cast %71 : vector<8x8xbf16> to vector<1x8x8xbf16>
    tpu.vector_store %arg17[%c2_37, %c0_38, %c0_39], %74 {strides = array<i32>} : memref<4x8x8xbf16, #tpu.memory_space<vmem>>, vector<1x8x8xbf16>,
    %75 = vector.extract_strided_slice %29 {offsets = [0, 24], sizes = [8, 8], strides = [1, 1]} : vector<8x96xf32> to vector<8x8xf32>
    %76 = arith.truncf %75 : vector<8x8xf32> to vector<8x8xbf16>
    %c3 = arith.constant 3 : index
    %c0_40 = arith.constant 0 : index
    %c0_41 = arith.constant 0 : index
    %77 = vector.load %arg15[%c3, %c0_40, %c0_41] : memref<4x8x8xbf16, #tpu.memory_space<vmem>>, vector<1x8x8xbf16>
    %78 = vector.shape_cast %77 : vector<1x8x8xbf16> to vector<8x8xbf16>
    %79 = vector.shape_cast %76 : vector<8x8xbf16> to vector<1x8x8xbf16>
    tpu.vector_store %arg15[%c3, %c0_40, %c0_41], %79 {strides = array<i32>} : memref<4x8x8xbf16, #tpu.memory_space<vmem>>, vector<1x8x8xbf16>,
    %80 = vector.extract_strided_slice %29 {offsets = [0, 56], sizes = [8, 8], strides = [1, 1]} : vector<8x96xf32> to vector<8x8xf32>
    %81 = arith.truncf %80 : vector<8x8xf32> to vector<8x8xbf16>
    %c3_42 = arith.constant 3 : index
    %c0_43 = arith.constant 0 : index
    %c0_44 = arith.constant 0 : index
    %82 = vector.load %arg16[%c3_42, %c0_43, %c0_44] : memref<4x8x8xbf16, #tpu.memory_space<vmem>>, vector<1x8x8xbf16>
    %83 = vector.shape_cast %82 : vector<1x8x8xbf16> to vector<8x8xbf16>
    %84 = vector.shape_cast %81 : vector<8x8xbf16> to vector<1x8x8xbf16>
    tpu.vector_store %arg16[%c3_42, %c0_43, %c0_44], %84 {strides = array<i32>} : memref<4x8x8xbf16, #tpu.memory_space<vmem>>, vector<1x8x8xbf16>,
    %85 = vector.extract_strided_slice %29 {offsets = [0, 88], sizes = [8, 8], strides = [1, 1]} : vector<8x96xf32> to vector<8x8xf32>
    %86 = arith.truncf %85 : vector<8x8xf32> to vector<8x8xbf16>
    %c3_45 = arith.constant 3 : index
    %c0_46 = arith.constant 0 : index
    %c0_47 = arith.constant 0 : index
    %87 = vector.load %arg17[%c3_45, %c0_46, %c0_47] : memref<4x8x8xbf16, #tpu.memory_space<vmem>>, vector<1x8x8xbf16>
    %88 = vector.shape_cast %87 : vector<1x8x8xbf16> to vector<8x8xbf16>
    %89 = vector.shape_cast %86 : vector<8x8xbf16> to vector<1x8x8xbf16>
    tpu.vector_store %arg17[%c3_45, %c0_46, %c0_47], %89 {strides = array<i32>} : memref<4x8x8xbf16, #tpu.memory_space<vmem>>, vector<1x8x8xbf16>,
    %c0_i32 = arith.constant 0 : i32
    %c4_i32 = arith.constant 4 : i32
    %90 = arith.addi %c0_i32, %c4_i32 : i32
    %c1_i32 = arith.constant 1 : i32
    scf.for %arg19 = %c0_i32 to %90 step %c1_i32  : i32 {
      %157 = arith.index_cast %arg19 : i32 to index
      %c0_92 = arith.constant 0 : index
      %c0_93 = arith.constant 0 : index
      %158 = vector.load %arg15[%157, %c0_92, %c0_93] : memref<4x8x8xbf16, #tpu.memory_space<vmem>>, vector<1x8x8xbf16>
      %159 = vector.shape_cast %158 : vector<1x8x8xbf16> to vector<8x8xbf16>
      %160 = arith.index_cast %arg19 : i32 to index
      %c0_94 = arith.constant 0 : index
      %c0_95 = arith.constant 0 : index
      %161 = vector.load %arg16[%160, %c0_94, %c0_95] : memref<4x8x8xbf16, #tpu.memory_space<vmem>>, vector<1x8x8xbf16>
      %162 = vector.shape_cast %161 : vector<1x8x8xbf16> to vector<8x8xbf16>
      %163 = arith.index_cast %arg19 : i32 to index
      %c0_96 = arith.constant 0 : index
      %c0_97 = arith.constant 0 : index
      %164 = vector.load %arg17[%163, %c0_96, %c0_97] : memref<4x8x8xbf16, #tpu.memory_space<vmem>>, vector<1x8x8xbf16>
      %165 = vector.shape_cast %164 : vector<1x8x8xbf16> to vector<8x8xbf16>
      %cst_98 = arith.constant dense<0.000000e+00> : vector<8x8xf32>
      %166 = tpu.matmul %159, %162, %cst_98 {dimension_numbers = #tpu.dot_dimension_numbers<[1], [1], [0], [0], [0, 0, 1, 0], [], []>} : vector<8x8xbf16>, vector<8x8xbf16>, vector<8x8xf32> -> vector<8x8xf32>
      %cst_99 = arith.constant dense<0xFF800000> : vector<8xf32>
      %167 = vector.multi_reduction <maximumf>, %166, %cst_99 [1] : vector<8x8xf32> to vector<8xf32>
      %168 = vector.shape_cast %167 : vector<8xf32> to vector<8x1xf32>
      %169 = vector.broadcast %168 : vector<8x1xf32> to vector<8x8xf32>
      %170 = arith.subf %166, %169 : vector<8x8xf32>
      %171 = math.exp %170 : vector<8x8xf32>
      %cst_100 = arith.constant dense<0.000000e+00> : vector<8xf32>
      %172 = vector.multi_reduction <add>, %171, %cst_100 [1] : vector<8x8xf32> to vector<8xf32>
      %173 = vector.shape_cast %172 : vector<8xf32> to vector<8x1xf32>
      %174 = arith.truncf %171 : vector<8x8xf32> to vector<8x8xbf16>
      %cst_101 = arith.constant dense<0.000000e+00> : vector<8x8xf32>
      %175 = tpu.matmul %174, %165, %cst_101 {dimension_numbers = #tpu.dot_dimension_numbers<[1], [0], [0], [1], [0, 0, 1, 1], [], []>} : vector<8x8xbf16>, vector<8x8xbf16>, vector<8x8xf32> -> vector<8x8xf32>
      %176 = tpu.reciprocal %173 {approx = true} : vector<8x1xf32> -> vector<8x1xf32>
      %177 = vector.broadcast %176 : vector<8x1xf32> to vector<8x8xf32>
      %178 = arith.mulf %175, %177 : vector<8x8xf32>
      %179 = arith.truncf %178 : vector<8x8xf32> to vector<8x8xbf16>
      %180 = arith.index_cast %arg19 : i32 to index
      %c0_102 = arith.constant 0 : index
      %c0_103 = arith.constant 0 : index
      %181 = vector.load %arg18[%180, %c0_102, %c0_103] : memref<4x8x8xbf16, #tpu.memory_space<vmem>>, vector<1x8x8xbf16>
      %182 = vector.shape_cast %181 : vector<1x8x8xbf16> to vector<8x8xbf16>
      %183 = vector.shape_cast %179 : vector<8x8xbf16> to vector<1x8x8xbf16>
      tpu.vector_store %arg18[%180, %c0_102, %c0_103], %183 {strides = array<i32>} : memref<4x8x8xbf16, #tpu.memory_space<vmem>>, vector<1x8x8xbf16>,
    }
    %c4_i32_48 = arith.constant 4 : i32
    %c0_49 = arith.constant 0 : index
    %c0_50 = arith.constant 0 : index
    %c0_51 = arith.constant 0 : index
    %91 = vector.load %arg18[%c0_49, %c0_50, %c0_51] : memref<4x8x8xbf16, #tpu.memory_space<vmem>>, vector<1x8x8xbf16>
    %92 = vector.shape_cast %91 : vector<1x8x8xbf16> to vector<8x8xbf16>
    %c1_52 = arith.constant 1 : index
    %c0_53 = arith.constant 0 : index
    %c0_54 = arith.constant 0 : index
    %93 = vector.load %arg18[%c1_52, %c0_53, %c0_54] : memref<4x8x8xbf16, #tpu.memory_space<vmem>>, vector<1x8x8xbf16>
    %94 = vector.shape_cast %93 : vector<1x8x8xbf16> to vector<8x8xbf16>
    %c2_55 = arith.constant 2 : index
    %c0_56 = arith.constant 0 : index
    %c0_57 = arith.constant 0 : index
    %95 = vector.load %arg18[%c2_55, %c0_56, %c0_57] : memref<4x8x8xbf16, #tpu.memory_space<vmem>>, vector<1x8x8xbf16>
    %96 = vector.shape_cast %95 : vector<1x8x8xbf16> to vector<8x8xbf16>
    %c3_58 = arith.constant 3 : index
    %c0_59 = arith.constant 0 : index
    %c0_60 = arith.constant 0 : index
    %97 = vector.load %arg18[%c3_58, %c0_59, %c0_60] : memref<4x8x8xbf16, #tpu.memory_space<vmem>>, vector<1x8x8xbf16>
    %98 = vector.shape_cast %97 : vector<1x8x8xbf16> to vector<8x8xbf16>
    %99 = tpu.concatenate %92, %94, %96, %98 in 1 : vector<8x8xbf16>, vector<8x8xbf16>, vector<8x8xbf16>, vector<8x8xbf16> -> vector<8x32xbf16>
    %c0_61 = arith.constant 0 : index
    %c0_62 = arith.constant 0 : index
    %100 = vector.load %arg6[%c0_61, %c0_62] : memref<32x32xbf16, #tpu.memory_space<vmem>>, vector<32x32xbf16>
    %cst_63 = arith.constant dense<0.000000e+00> : vector<8x32xf32>
    %101 = tpu.matmul %99, %100, %cst_63 {dimension_numbers = #tpu.dot_dimension_numbers<[1], [0], [0], [1], [0, 0, 1, 1], [], []>} : vector<8x32xbf16>, vector<32x32xbf16>, vector<8x32xf32> -> vector<8x32xf32>
    %c0_64 = arith.constant 0 : index
    %c0_65 = arith.constant 0 : index
    %102 = vector.load %arg7[%c0_64, %c0_65] : memref<1x32xf32, #tpu.memory_space<vmem>>, vector<1x32xf32>
    %103 = vector.broadcast %102 : vector<1x32xf32> to vector<8x32xf32>
    %104 = arith.addf %101, %103 : vector<8x32xf32>
    %105 = arith.addf %1, %104 : vector<8x32xf32>
    %c0_66 = arith.constant 0 : index
    %c0_67 = arith.constant 0 : index
    %106 = vector.load %arg8[%c0_66, %c0_67] : memref<1x32xf32, #tpu.memory_space<vmem>>, vector<1x32xf32>
    %c0_68 = arith.constant 0 : index
    %c0_69 = arith.constant 0 : index
    %107 = vector.load %arg9[%c0_68, %c0_69] : memref<1x32xf32, #tpu.memory_space<vmem>>, vector<1x32xf32>
    %cst_70 = arith.constant dense<0.000000e+00> : vector<8xf32>
    %108 = vector.multi_reduction <add>, %105, %cst_70 [1] : vector<8x32xf32> to vector<8xf32>
    %109 = vector.shape_cast %108 : vector<8xf32> to vector<8x1xf32>
    %cst_71 = arith.constant 3.200000e+01 : f32
    %110 = vector.broadcast %cst_71 : f32 to vector<8x1xf32>
    %111 = arith.divf %109, %110 : vector<8x1xf32>
    %112 = vector.broadcast %111 : vector<8x1xf32> to vector<8x32xf32>
    %113 = arith.subf %105, %112 : vector<8x32xf32>
    %114 = arith.mulf %113, %113 : vector<8x32xf32>
    %cst_72 = arith.constant dense<0.000000e+00> : vector<8xf32>
    %115 = vector.multi_reduction <add>, %114, %cst_72 [1] : vector<8x32xf32> to vector<8xf32>
    %116 = vector.shape_cast %115 : vector<8xf32> to vector<8x1xf32>
    %cst_73 = arith.constant 3.200000e+01 : f32
    %117 = vector.broadcast %cst_73 : f32 to vector<8x1xf32>
    %118 = arith.divf %116, %117 : vector<8x1xf32>
    %cst_74 = arith.constant 9.99999974E-6 : f32
    %119 = vector.broadcast %cst_74 : f32 to vector<8x1xf32>
    %120 = arith.addf %118, %119 : vector<8x1xf32>
    %121 = math.rsqrt %120 : vector<8x1xf32>
    %122 = vector.broadcast %121 : vector<8x1xf32> to vector<8x32xf32>
    %123 = arith.mulf %113, %122 : vector<8x32xf32>
    %124 = vector.broadcast %106 : vector<1x32xf32> to vector<8x32xf32>
    %125 = arith.mulf %123, %124 : vector<8x32xf32>
    %126 = vector.broadcast %107 : vector<1x32xf32> to vector<8x32xf32>
    %127 = arith.addf %125, %126 : vector<8x32xf32>
    %128 = arith.truncf %127 : vector<8x32xf32> to vector<8x32xbf16>
    %c0_75 = arith.constant 0 : index
    %c0_76 = arith.constant 0 : index
    %129 = vector.load %arg10[%c0_75, %c0_76] : memref<32x128xbf16, #tpu.memory_space<vmem>>, vector<32x128xbf16>
    %cst_77 = arith.constant dense<0.000000e+00> : vector<8x128xf32>
    %130 = tpu.matmul %128, %129, %cst_77 {dimension_numbers = #tpu.dot_dimension_numbers<[1], [0], [0], [1], [0, 0, 1, 1], [], []>} : vector<8x32xbf16>, vector<32x128xbf16>, vector<8x128xf32> -> vector<8x128xf32>
    %c0_78 = arith.constant 0 : index
    %c0_79 = arith.constant 0 : index
    %131 = vector.load %arg11[%c0_78, %c0_79] : memref<1x128xf32, #tpu.memory_space<vmem>>, vector<1x128xf32>
    %132 = vector.broadcast %131 : vector<1x128xf32> to vector<8x128xf32>
    %133 = arith.addf %130, %132 : vector<8x128xf32>
    %cst_80 = arith.constant 5.000000e-01 : f32
    %134 = vector.broadcast %cst_80 : f32 to vector<8x128xf32>
    %135 = arith.mulf %134, %133 : vector<8x128xf32>
    %cst_81 = arith.constant 4.471500e-02 : f32
    %136 = vector.broadcast %cst_81 : f32 to vector<8x128xf32>
    %137 = arith.mulf %136, %133 : vector<8x128xf32>
    %138 = arith.mulf %137, %133 : vector<8x128xf32>
    %139 = arith.mulf %138, %133 : vector<8x128xf32>
    %140 = arith.addf %133, %139 : vector<8x128xf32>
    %cst_82 = arith.constant 0.797884583 : f32
    %141 = vector.broadcast %cst_82 : f32 to vector<8x128xf32>
    %142 = arith.mulf %141, %140 : vector<8x128xf32>
    %143 = math.tanh %142 : vector<8x128xf32>
    %cst_83 = arith.constant 1.000000e+00 : f32
    %144 = vector.broadcast %cst_83 : f32 to vector<8x128xf32>
    %145 = arith.addf %144, %143 : vector<8x128xf32>
    %146 = arith.mulf %135, %145 : vector<8x128xf32>
    %147 = arith.truncf %146 : vector<8x128xf32> to vector<8x128xbf16>
    %c0_84 = arith.constant 0 : index
    %c0_85 = arith.constant 0 : index
    %148 = vector.load %arg12[%c0_84, %c0_85] : memref<128x32xbf16, #tpu.memory_space<vmem>>, vector<128x32xbf16>
    %cst_86 = arith.constant dense<0.000000e+00> : vector<8x32xf32>
    %149 = tpu.matmul %147, %148, %cst_86 {dimension_numbers = #tpu.dot_dimension_numbers<[1], [0], [0], [1], [0, 0, 1, 1], [], []>} : vector<8x128xbf16>, vector<128x32xbf16>, vector<8x32xf32> -> vector<8x32xf32>
    %c0_87 = arith.constant 0 : index
    %c0_88 = arith.constant 0 : index
    %150 = vector.load %arg13[%c0_87, %c0_88] : memref<1x32xf32, #tpu.memory_space<vmem>>, vector<1x32xf32>
    %151 = vector.broadcast %150 : vector<1x32xf32> to vector<8x32xf32>
    %152 = arith.addf %149, %151 : vector<8x32xf32>
    %153 = arith.addf %105, %152 : vector<8x32xf32>
    %c0_89 = arith.constant 0 : index
    %c0_90 = arith.constant 0 : index
    %c0_91 = arith.constant 0 : index
    %154 = vector.load %arg14[%c0_89, %c0_90, %c0_91] : memref<1x8x32xf32, #tpu.memory_space<vmem>>, vector<1x8x32xf32>
    %155 = vector.shape_cast %154 : vector<1x8x32xf32> to vector<8x32xf32>
    %156 = vector.shape_cast %153 : vector<8x32xf32> to vector<1x8x32xf32>
    tpu.vector_store %arg14[%c0_89, %c0_90, %c0_91], %156 {strides = array<i32>} : memref<1x8x32xf32, #tpu.memory_space<vmem>>, vector<1x8x32xf32>,
    return
  }
  func.func @transform_0(%arg0: i32) -> (i32, i32, i32) {
    %c0_i32 = arith.constant 0 : i32
    %c0_i32_0 = arith.constant 0 : i32
    %c0_i32_1 = arith.constant 0 : i32
    return %arg0, %c0_i32, %c0_i32_0 : i32, i32, i32
  }
  func.func @transform_1(%arg0: i32) -> (i32, i32) {
    %c0_i32 = arith.constant 0 : i32
    %c0_i32_0 = arith.constant 0 : i32
    %c0_i32_1 = arith.constant 0 : i32
    return %c0_i32, %c0_i32_0 : i32, i32
  }
  func.func @transform_2(%arg0: i32) -> (i32, i32) {
    %c0_i32 = arith.constant 0 : i32
    %c0_i32_0 = arith.constant 0 : i32
    %c0_i32_1 = arith.constant 0 : i32
    return %c0_i32, %c0_i32_0 : i32, i32
  }
  func.func @transform_3(%arg0: i32) -> (i32, i32) {
    %c0_i32 = arith.constant 0 : i32
    %c0_i32_0 = arith.constant 0 : i32
    %c0_i32_1 = arith.constant 0 : i32
    return %c0_i32, %c0_i32_0 : i32, i32
  }
  func.func @transform_4(%arg0: i32) -> (i32, i32) {
    %c0_i32 = arith.constant 0 : i32
    %c0_i32_0 = arith.constant 0 : i32
    %c0_i32_1 = arith.constant 0 : i32
    return %c0_i32, %c0_i32_0 : i32, i32
  }
  func.func @transform_5(%arg0: i32) -> (i32, i32) {
    %c0_i32 = arith.constant 0 : i32
    %c0_i32_0 = arith.constant 0 : i32
    %c0_i32_1 = arith.constant 0 : i32
    return %c0_i32, %c0_i32_0 : i32, i32
  }
  func.func @transform_6(%arg0: i32) -> (i32, i32) {
    %c0_i32 = arith.constant 0 : i32
    %c0_i32_0 = arith.constant 0 : i32
    %c0_i32_1 = arith.constant 0 : i32
    return %c0_i32, %c0_i32_0 : i32, i32
  }
  func.func @transform_7(%arg0: i32) -> (i32, i32) {
    %c0_i32 = arith.constant 0 : i32
    %c0_i32_0 = arith.constant 0 : i32
    %c0_i32_1 = arith.constant 0 : i32
    return %c0_i32, %c0_i32_0 : i32, i32
  }
  func.func @transform_8(%arg0: i32) -> (i32, i32) {
    %c0_i32 = arith.constant 0 : i32
    %c0_i32_0 = arith.constant 0 : i32
    %c0_i32_1 = arith.constant 0 : i32
    return %c0_i32, %c0_i32_0 : i32, i32
  }
  func.func @transform_9(%arg0: i32) -> (i32, i32) {
    %c0_i32 = arith.constant 0 : i32
    %c0_i32_0 = arith.constant 0 : i32
    %c0_i32_1 = arith.constant 0 : i32
    return %c0_i32, %c0_i32_0 : i32, i32
  }
  func.func @transform_10(%arg0: i32) -> (i32, i32) {
    %c0_i32 = arith.constant 0 : i32
    %c0_i32_0 = arith.constant 0 : i32
    %c0_i32_1 = arith.constant 0 : i32
    return %c0_i32, %c0_i32_0 : i32, i32
  }
  func.func @transform_11(%arg0: i32) -> (i32, i32) {
    %c0_i32 = arith.constant 0 : i32
    %c0_i32_0 = arith.constant 0 : i32
    %c0_i32_1 = arith.constant 0 : i32
    return %c0_i32, %c0_i32_0 : i32, i32
  }
  func.func @transform_12(%arg0: i32) -> (i32, i32) {
    %c0_i32 = arith.constant 0 : i32
    %c0_i32_0 = arith.constant 0 : i32
    %c0_i32_1 = arith.constant 0 : i32
    return %c0_i32, %c0_i32_0 : i32, i32
  }
  func.func @transform_13(%arg0: i32) -> (i32, i32, i32) {
    %c0_i32 = arith.constant 0 : i32
    %c0_i32_0 = arith.constant 0 : i32
    %c0_i32_1 = arith.constant 0 : i32
    return %arg0, %c0_i32, %c0_i32_0 : i32, i32, i32
  }
}

</mosaic_0001>

<llo_original>
// kernel: tpu_custom_call.1
$region0: #{tpu_custom_call.1}
  #allocation0 [shape = 'u32[]', space=smem, size = 0x4, offset = 0x4, fixed_abs, tag = 'smem constant byte address 0x4 - core index']
  #allocation1 [shape = 'u32[144,128]{1,0:T(1,128)}', space=vmem, size = 0x12000, scoped, tag = 'internal scratch']
  #allocation2 [shape = 'bf16[4,8,8]{2,1,0:T(8,128)(2,1)}', space=vmem, size = 0x2000, scoped, tag = 'scratch operand']
  #allocation3 [shape = 'bf16[4,8,8]{2,1,0:T(8,128)(2,1)}', space=vmem, size = 0x2000, scoped, tag = 'scratch operand']
  #allocation4 [shape = 'bf16[4,8,8]{2,1,0:T(8,128)(2,1)}', space=vmem, size = 0x2000, scoped, tag = 'scratch operand']
  #allocation5 [shape = 'bf16[4,8,8]{2,1,0:T(8,128)(2,1)}', space=vmem, size = 0x2000, scoped, tag = 'scratch operand']
  %s0 = inlined_call_operand.vmem [shape: f32[2,8,32], index: 0, kind: input, shape index: {}]
  %s1 = inlined_call_operand.vmem [shape: f32[1,32], index: 1, kind: input, shape index: {}]
  %s2 = inlined_call_operand.vmem [shape: f32[1,32], index: 2, kind: input, shape index: {}]
  %s3 = inlined_call_operand.vmem [shape: bf16[32,96], index: 3, kind: input, shape index: {}]
  %s4 = inlined_call_operand.vmem [shape: f32[1,96], index: 4, kind: input, shape index: {}]
  %s5 = inlined_call_operand.vmem [shape: bf16[32,32], index: 5, kind: input, shape index: {}]
  %s6 = inlined_call_operand.vmem [shape: f32[1,32], index: 6, kind: input, shape index: {}]
  %s7 = inlined_call_operand.vmem [shape: f32[1,32], index: 7, kind: input, shape index: {}]
  %s8 = inlined_call_operand.vmem [shape: f32[1,32], index: 8, kind: input, shape index: {}]
  %s9 = inlined_call_operand.vmem [shape: bf16[32,128], index: 9, kind: input, shape index: {}]
  %s10 = inlined_call_operand.vmem [shape: f32[1,128], index: 10, kind: input, shape index: {}]
  %s11 = inlined_call_operand.vmem [shape: bf16[128,32], index: 11, kind: input, shape index: {}]
  %s12 = inlined_call_operand.vmem [shape: f32[1,32], index: 12, kind: input, shape index: {}]
  %s13 = inlined_call_operand.hbm [shape: f32[2,8,32], index: 13, kind: output, shape index: {}]
  %s14 = sld [smem:[#allocation0]]
  $region92: #{tpu_custom_call.1} parent=0
    _
  %s16 = ssub.s32 1, %s14
  %s17 = scalar_select 0, %s16, %s14
  $region1: #{tpu_custom_call.1} parent=0
    #allocation6 [shape = 'u8[8192]{0}', space=vmem, size = 0x2000, scoped, tag = 'output window, operand 0']
    #allocation7 [shape = 's32[2]{0}', space=sflag, size = 0x8, scoped, tag = 'scoped memory for tpu_custom_call.1']
    %18 = vsyncpa [#allocation7], 0
    %s19 = scalar_lea.sflag [#allocation7], 1
    %20 = vsyncpa %s19, 0
    loop: start=0, step=1, limit=4
    $region2: #{tpu_custom_call.1} parent=1 // loop_pre_header
      _
    $region3: #{tpu_custom_call.1} parent=1 // loop_header
      %s22 = sphi 0, %s26
      %p23 = scmp.ge.s32.totalorder %s22, 4
      %s32 = sphi 0, %s34
      %s35 = sphi 0, %s32
      %s36 = sphi 0, %s35
      %s52 = sphi 0, %s36
      %s56 = sphi 0, %s56
      %s58 = sphi 0, %s56
      %s59 = sphi 0, %s58
      %s73 = sphi 0, %s59
      %s77 = sphi 0, %s77
      %s79 = sphi 0, %s77
      %s80 = sphi 0, %s79
      %s94 = sphi 0, %s80
      %s98 = sphi 0, %s98
      %s100 = sphi 0, %s98
      %s101 = sphi 0, %s100
      %s115 = sphi 0, %s101
      %s119 = sphi 0, %s119
      %s121 = sphi 0, %s119
      %s122 = sphi 0, %s121
      %s136 = sphi 0, %s122
      %s140 = sphi 0, %s140
      %s142 = sphi 0, %s140
      %s143 = sphi 0, %s142
      %s157 = sphi 0, %s143
      %s161 = sphi 0, %s161
      %s163 = sphi 0, %s161
      %s164 = sphi 0, %s163
      %s178 = sphi 0, %s164
      %s182 = sphi 0, %s182
      %s184 = sphi 0, %s182
      %s185 = sphi 0, %s184
      %s199 = sphi 0, %s185
      %s203 = sphi 0, %s203
      %s205 = sphi 0, %s203
      %s206 = sphi 0, %s205
      %s220 = sphi 0, %s206
      %s224 = sphi 0, %s224
      %s226 = sphi 0, %s224
      %s227 = sphi 0, %s226
      %s241 = sphi 0, %s227
      %s245 = sphi 0, %s245
      %s247 = sphi 0, %s245
      %s248 = sphi 0, %s247
      %s262 = sphi 0, %s248
      %s266 = sphi 0, %s266
      %s268 = sphi 0, %s266
      %s269 = sphi 0, %s268
      %s283 = sphi 0, %s269
      %s287 = sphi 0, %s287
      %s289 = sphi 0, %s287
      %s290 = sphi 0, %s289
      %s304 = sphi 0, %s290
      %s310 = sphi 0, %s312
      %s313 = sphi 0, %s310
      %s314 = sphi 0, %s313
      %s330 = sphi 0, %s314
    $region4: #{tpu_custom_call.1} parent=1 // loop_header_branch
      %25 = sbr.rel (%p23) target = $region8
    $region5: #{tpu_custom_call.1} parent=1 // loop_body
      %s27 = ssub.s32 %s22, 1
      %s28 = ssub.s32 %s22, 2
      %s29 = sadd.s32 %s22, 1
      %s30 = ssub.s32 %s22, %s29
      %p31 = scmp.eq.s32.totalorder %s30, 0
      %s33 = sadd.s32 %s32, 1
      %s34 = scalar_select %p31, %s32, %s33
      %p37 = pneg %p31
      %p38 = scmp.eq.s32.totalorder %s22, 1
      %p39 = por %p37, %p38
      %p40 = scmp.ne.s32.totalorder %s32, %s35
      %p41 = scmp.eq.s32.totalorder %s22, 0
      %p42 = por %p40, %p41
      %p43 = scmp.ne.s32.totalorder %s32, %s35
      %p44 = scmp.eq.s32.totalorder %s27, 1
      %p45 = por %p43, %p44
      %p46 = scmp.ne.s32.totalorder %s35, %s36
      %p47 = scmp.eq.s32.totalorder %s27, 0
      %p48 = por %p46, %p47
      %p49 = scmp.ne.s32.totalorder %s35, %s36
      %p50 = scmp.eq.s32.totalorder %s28, 1
      %p51 = por %p49, %p50
      %p53 = scmp.ne.s32.totalorder %s36, %s52
      %p54 = scmp.eq.s32.totalorder %s28, 0
      %p55 = por %p53, %p54
      %s57 = sadd.s32 %s56, 1
      %p60 = scmp.eq.s32.totalorder %s22, 1
      %p61 = scmp.ne.s32.totalorder %s56, %s58
      %p62 = scmp.eq.s32.totalorder %s22, 0
      %p63 = por %p61, %p62
      %p64 = scmp.ne.s32.totalorder %s56, %s58
      %p65 = scmp.eq.s32.totalorder %s27, 1
      %p66 = por %p64, %p65
      %p67 = scmp.ne.s32.totalorder %s58, %s59
      %p68 = scmp.eq.s32.totalorder %s27, 0
      %p69 = por %p67, %p68
      %p70 = scmp.ne.s32.totalorder %s58, %s59
      %p71 = scmp.eq.s32.totalorder %s28, 1
      %p72 = por %p70, %p71
      %p74 = scmp.ne.s32.totalorder %s59, %s73
      %p75 = scmp.eq.s32.totalorder %s28, 0
      %p76 = por %p74, %p75
      %s78 = sadd.s32 %s77, 1
      %p81 = scmp.eq.s32.totalorder %s22, 1
      %p82 = scmp.ne.s32.totalorder %s77, %s79
      %p83 = scmp.eq.s32.totalorder %s22, 0
      %p84 = por %p82, %p83
      %p85 = scmp.ne.s32.totalorder %s77, %s79
      %p86 = scmp.eq.s32.totalorder %s27, 1
      %p87 = por %p85, %p86
      %p88 = scmp.ne.s32.totalorder %s79, %s80
      %p89 = scmp.eq.s32.totalorder %s27, 0
      %p90 = por %p88, %p89
      %p91 = scmp.ne.s32.totalorder %s79, %s80
      %p92 = scmp.eq.s32.totalorder %s28, 1
      %p93 = por %p91, %p92
      %p95 = scmp.ne.s32.totalorder %s80, %s94
      %p96 = scmp.eq.s32.totalorder %s28, 0
      %p97 = por %p95, %p96
      %s99 = sadd.s32 %s98, 1
      %p102 = scmp.eq.s32.totalorder %s22, 1
      %p103 = scmp.ne.s32.totalorder %s98, %s100
      %p104 = scmp.eq.s32.totalorder %s22, 0
      %p105 = por %p103, %p104
      %p106 = scmp.ne.s32.totalorder %s98, %s100
      %p107 = scmp.eq.s32.totalorder %s27, 1
      %p108 = por %p106, %p107
      %p109 = scmp.ne.s32.totalorder %s100, %s101
      %p110 = scmp.eq.s32.totalorder %s27, 0
      %p111 = por %p109, %p110
      %p112 = scmp.ne.s32.totalorder %s100, %s101
      %p113 = scmp.eq.s32.totalorder %s28, 1
      %p114 = por %p112, %p113
      %p116 = scmp.ne.s32.totalorder %s101, %s115
      %p117 = scmp.eq.s32.totalorder %s28, 0
      %p118 = por %p116, %p117
      %s120 = sadd.s32 %s119, 1
      %p123 = scmp.eq.s32.totalorder %s22, 1
      %p124 = scmp.ne.s32.totalorder %s119, %s121
      %p125 = scmp.eq.s32.totalorder %s22, 0
      %p126 = por %p124, %p125
      %p127 = scmp.ne.s32.totalorder %s119, %s121
      %p128 = scmp.eq.s32.totalorder %s27, 1
      %p129 = por %p127, %p128
      %p130 = scmp.ne.s32.totalorder %s121, %s122
      %p131 = scmp.eq.s32.totalorder %s27, 0
      %p132 = por %p130, %p131
      %p133 = scmp.ne.s32.totalorder %s121, %s122
      %p134 = scmp.eq.s32.totalorder %s28, 1
      %p135 = por %p133, %p134
      %p137 = scmp.ne.s32.totalorder %s122, %s136
      %p138 = scmp.eq.s32.totalorder %s28, 0
      %p139 = por %p137, %p138
      %s141 = sadd.s32 %s140, 1
      %p144 = scmp.eq.s32.totalorder %s22, 1
      %p145 = scmp.ne.s32.totalorder %s140, %s142
      %p146 = scmp.eq.s32.totalorder %s22, 0
      %p147 = por %p145, %p146
      %p148 = scmp.ne.s32.totalorder %s140, %s142
      %p149 = scmp.eq.s32.totalorder %s27, 1
      %p150 = por %p148, %p149
      %p151 = scmp.ne.s32.totalorder %s142, %s143
      %p152 = scmp.eq.s32.totalorder %s27, 0
      %p153 = por %p151, %p152
      %p154 = scmp.ne.s32.totalorder %s142, %s143
      %p155 = scmp.eq.s32.totalorder %s28, 1
      %p156 = por %p154, %p155
      %p158 = scmp.ne.s32.totalorder %s143, %s157
      %p159 = scmp.eq.s32.totalorder %s28, 0
      %p160 = por %p158, %p159
      %s162 = sadd.s32 %s161, 1
      %p165 = scmp.eq.s32.totalorder %s22, 1
      %p166 = scmp.ne.s32.totalorder %s161, %s163
      %p167 = scmp.eq.s32.totalorder %s22, 0
      %p168 = por %p166, %p167
      %p169 = scmp.ne.s32.totalorder %s161, %s163
      %p170 = scmp.eq.s32.totalorder %s27, 1
      %p171 = por %p169, %p170
      %p172 = scmp.ne.s32.totalorder %s163, %s164
      %p173 = scmp.eq.s32.totalorder %s27, 0
      %p174 = por %p172, %p173
      %p175 = scmp.ne.s32.totalorder %s163, %s164
      %p176 = scmp.eq.s32.totalorder %s28, 1
      %p177 = por %p175, %p176
      %p179 = scmp.ne.s32.totalorder %s164, %s178
      %p180 = scmp.eq.s32.totalorder %s28, 0
      %p181 = por %p179, %p180
      %s183 = sadd.s32 %s182, 1
      %p186 = scmp.eq.s32.totalorder %s22, 1
      %p187 = scmp.ne.s32.totalorder %s182, %s184
      %p188 = scmp.eq.s32.totalorder %s22, 0
      %p189 = por %p187, %p188
      %p190 = scmp.ne.s32.totalorder %s182, %s184
      %p191 = scmp.eq.s32.totalorder %s27, 1
      %p192 = por %p190, %p191
      %p193 = scmp.ne.s32.totalorder %s184, %s185
      %p194 = scmp.eq.s32.totalorder %s27, 0
      %p195 = por %p193, %p194
      %p196 = scmp.ne.s32.totalorder %s184, %s185
      %p197 = scmp.eq.s32.totalorder %s28, 1
      %p198 = por %p196, %p197
      %p200 = scmp.ne.s32.totalorder %s185, %s199
      %p201 = scmp.eq.s32.totalorder %s28, 0
      %p202 = por %p200, %p201
      %s204 = sadd.s32 %s203, 1
      %p207 = scmp.eq.s32.totalorder %s22, 1
      %p208 = scmp.ne.s32.totalorder %s203, %s205
      %p209 = scmp.eq.s32.totalorder %s22, 0
      %p210 = por %p208, %p209
      %p211 = scmp.ne.s32.totalorder %s203, %s205
      %p212 = scmp.eq.s32.totalorder %s27, 1
      %p213 = por %p211, %p212
      %p214 = scmp.ne.s32.totalorder %s205, %s206
      %p215 = scmp.eq.s32.totalorder %s27, 0
      %p216 = por %p214, %p215
      %p217 = scmp.ne.s32.totalorder %s205, %s206
      %p218 = scmp.eq.s32.totalorder %s28, 1
      %p219 = por %p217, %p218
      %p221 = scmp.ne.s32.totalorder %s206, %s220
      %p222 = scmp.eq.s32.totalorder %s28, 0
      %p223 = por %p221, %p222
      %s225 = sadd.s32 %s224, 1
      %p228 = scmp.eq.s32.totalorder %s22, 1
      %p229 = scmp.ne.s32.totalorder %s224, %s226
      %p230 = scmp.eq.s32.totalorder %s22, 0
      %p231 = por %p229, %p230
      %p232 = scmp.ne.s32.totalorder %s224, %s226
      %p233 = scmp.eq.s32.totalorder %s27, 1
      %p234 = por %p232, %p233
      %p235 = scmp.ne.s32.totalorder %s226, %s227
      %p236 = scmp.eq.s32.totalorder %s27, 0
      %p237 = por %p235, %p236
      %p238 = scmp.ne.s32.totalorder %s226, %s227
      %p239 = scmp.eq.s32.totalorder %s28, 1
      %p240 = por %p238, %p239
      %p242 = scmp.ne.s32.totalorder %s227, %s241
      %p243 = scmp.eq.s32.totalorder %s28, 0
      %p244 = por %p242, %p243
      %s246 = sadd.s32 %s245, 1
      %p249 = scmp.eq.s32.totalorder %s22, 1
      %p250 = scmp.ne.s32.totalorder %s245, %s247
      %p251 = scmp.eq.s32.totalorder %s22, 0
      %p252 = por %p250, %p251
      %p253 = scmp.ne.s32.totalorder %s245, %s247
      %p254 = scmp.eq.s32.totalorder %s27, 1
      %p255 = por %p253, %p254
      %p256 = scmp.ne.s32.totalorder %s247, %s248
      %p257 = scmp.eq.s32.totalorder %s27, 0
      %p258 = por %p256, %p257
      %p259 = scmp.ne.s32.totalorder %s247, %s248
      %p260 = scmp.eq.s32.totalorder %s28, 1
      %p261 = por %p259, %p260
      %p263 = scmp.ne.s32.totalorder %s248, %s262
      %p264 = scmp.eq.s32.totalorder %s28, 0
      %p265 = por %p263, %p264
      %s267 = sadd.s32 %s266, 1
      %p270 = scmp.eq.s32.totalorder %s22, 1
      %p271 = scmp.ne.s32.totalorder %s266, %s268
      %p272 = scmp.eq.s32.totalorder %s22, 0
      %p273 = por %p271, %p272
      %p274 = scmp.ne.s32.totalorder %s266, %s268
      %p275 = scmp.eq.s32.totalorder %s27, 1
      %p276 = por %p274, %p275
      %p277 = scmp.ne.s32.totalorder %s268, %s269
      %p278 = scmp.eq.s32.totalorder %s27, 0
      %p279 = por %p277, %p278
      %p280 = scmp.ne.s32.totalorder %s268, %s269
      %p281 = scmp.eq.s32.totalorder %s28, 1
      %p282 = por %p280, %p281
      %p284 = scmp.ne.s32.totalorder %s269, %s283
      %p285 = scmp.eq.s32.totalorder %s28, 0
      %p286 = por %p284, %p285
      %s288 = sadd.s32 %s287, 1
      %p291 = scmp.eq.s32.totalorder %s22, 1
      %p292 = scmp.ne.s32.totalorder %s287, %s289
      %p293 = scmp.eq.s32.totalorder %s22, 0
      %p294 = por %p292, %p293
      %p295 = scmp.ne.s32.totalorder %s287, %s289
      %p296 = scmp.eq.s32.totalorder %s27, 1
      %p297 = por %p295, %p296
      %p298 = scmp.ne.s32.totalorder %s289, %s290
      %p299 = scmp.eq.s32.totalorder %s27, 0
      %p300 = por %p298, %p299
      %p301 = scmp.ne.s32.totalorder %s289, %s290
      %p302 = scmp.eq.s32.totalorder %s28, 1
      %p303 = por %p301, %p302
      %p305 = scmp.ne.s32.totalorder %s290, %s304
      %p306 = scmp.eq.s32.totalorder %s28, 0
      %p307 = por %p305, %p306
      %s308 = ssub.s32 %s22, %s29
      %p309 = scmp.eq.s32.totalorder %s308, 0
      %s311 = sadd.s32 %s310, 1
      %s312 = scalar_select %p309, %s310, %s311
      %p315 = pneg %p309
      %p316 = scmp.eq.s32.totalorder %s22, 1
      %p317 = por %p315, %p316
      %p318 = scmp.ne.s32.totalorder %s310, %s313
      %p319 = scmp.eq.s32.totalorder %s22, 0
      %p320 = por %p318, %p319
      %p321 = scmp.ne.s32.totalorder %s310, %s313
      %p322 = scmp.eq.s32.totalorder %s27, 1
      %p323 = por %p321, %p322
      %p324 = scmp.ne.s32.totalorder %s313, %s314
      %p325 = scmp.eq.s32.totalorder %s27, 0
      %p326 = por %p324, %p325
      %p327 = scmp.ne.s32.totalorder %s313, %s314
      %p328 = scmp.eq.s32.totalorder %s28, 1
      %p329 = por %p327, %p328
      %p331 = scmp.ne.s32.totalorder %s314, %s330
      %p332 = scmp.eq.s32.totalorder %s28, 0
      %p333 = por %p331, %p332
      %p334 = scmp.le.s32.totalorder 1, %s22
      %p335 = scmp.lt.s32.totalorder %s22, 3
      %p336 = pnand %p334, %p335
      %p337 = pneg %p336
      // Predicated region
      $region9: #{tpu_custom_call.1} parent=5 // pred_check
        _
      $region10: #{tpu_custom_call.1} parent=5 // pred_check_branch
        %339 = sbr.rel (%p336) target = $region12
      $region11: #{tpu_custom_call.1} parent=5 // pred_region
        %s340 = ssub.s32 %s22, 1
        // Predicated region
        $region13: #{tpu_custom_call.1} parent=11 // pred_check
          %p341 = pneg %p69
        $region14: #{tpu_custom_call.1} parent=11 // pred_check_branch
          %343 = sbr.rel (%p341) target = $region16
        $region15: #{tpu_custom_call.1} parent=11 // pred_region
          _
        $region16: #{tpu_custom_call.1} parent=11 // pred_fallthru
          _
        // Predicated region
        $region17: #{tpu_custom_call.1} parent=11 // pred_check
          %p344 = pneg %p90
        $region18: #{tpu_custom_call.1} parent=11 // pred_check_branch
          %346 = sbr.rel (%p344) target = $region20
        $region19: #{tpu_custom_call.1} parent=11 // pred_region
          _
        $region20: #{tpu_custom_call.1} parent=11 // pred_fallthru
          _
        // Predicated region
        $region21: #{tpu_custom_call.1} parent=11 // pred_check
          %p347 = pneg %p111
        $region22: #{tpu_custom_call.1} parent=11 // pred_check_branch
          %349 = sbr.rel (%p347) target = $region24
        $region23: #{tpu_custom_call.1} parent=11 // pred_region
          _
        $region24: #{tpu_custom_call.1} parent=11 // pred_fallthru
          _
        // Predicated region
        $region25: #{tpu_custom_call.1} parent=11 // pred_check
          %p350 = pneg %p132
        $region26: #{tpu_custom_call.1} parent=11 // pred_check_branch
          %352 = sbr.rel (%p350) target = $region28
        $region27: #{tpu_custom_call.1} parent=11 // pred_region
          _
        $region28: #{tpu_custom_call.1} parent=11 // pred_fallthru
          _
        // Predicated region
        $region29: #{tpu_custom_call.1} parent=11 // pred_check
          %p353 = pneg %p153
        $region30: #{tpu_custom_call.1} parent=11 // pred_check_branch
          %355 = sbr.rel (%p353) target = $region32
        $region31: #{tpu_custom_call.1} parent=11 // pred_region
          _
        $region32: #{tpu_custom_call.1} parent=11 // pred_fallthru
          _
        // Predicated region
        $region33: #{tpu_custom_call.1} parent=11 // pred_check
          %p356 = pneg %p174
        $region34: #{tpu_custom_call.1} parent=11 // pred_check_branch
          %358 = sbr.rel (%p356) target = $region36
        $region35: #{tpu_custom_call.1} parent=11 // pred_region
          _
        $region36: #{tpu_custom_call.1} parent=11 // pred_fallthru
          _
        // Predicated region
        $region37: #{tpu_custom_call.1} parent=11 // pred_check
          %p359 = pneg %p195
        $region38: #{tpu_custom_call.1} parent=11 // pred_check_branch
          %361 = sbr.rel (%p359) target = $region40
        $region39: #{tpu_custom_call.1} parent=11 // pred_region
          _
        $region40: #{tpu_custom_call.1} parent=11 // pred_fallthru
          _
        // Predicated region
        $region41: #{tpu_custom_call.1} parent=11 // pred_check
          %p362 = pneg %p216
        $region42: #{tpu_custom_call.1} parent=11 // pred_check_branch
          %364 = sbr.rel (%p362) target = $region44
        $region43: #{tpu_custom_call.1} parent=11 // pred_region
          _
        $region44: #{tpu_custom_call.1} parent=11 // pred_fallthru
          _
        // Predicated region
        $region45: #{tpu_custom_call.1} parent=11 // pred_check
          %p365 = pneg %p237
        $region46: #{tpu_custom_call.1} parent=11 // pred_check_branch
          %367 = sbr.rel (%p365) target = $region48
        $region47: #{tpu_custom_call.1} parent=11 // pred_region
          _
        $region48: #{tpu_custom_call.1} parent=11 // pred_fallthru
          _
        // Predicated region
        $region49: #{tpu_custom_call.1} parent=11 // pred_check
          %p368 = pneg %p258
        $region50: #{tpu_custom_call.1} parent=11 // pred_check_branch
          %370 = sbr.rel (%p368) target = $region52
        $region51: #{tpu_custom_call.1} parent=11 // pred_region
          _
        $region52: #{tpu_custom_call.1} parent=11 // pred_fallthru
          _
        // Predicated region
        $region53: #{tpu_custom_call.1} parent=11 // pred_check
          %p371 = pneg %p279
        $region54: #{tpu_custom_call.1} parent=11 // pred_check_branch
          %373 = sbr.rel (%p371) target = $region56
        $region55: #{tpu_custom_call.1} parent=11 // pred_region
          _
        $region56: #{tpu_custom_call.1} parent=11 // pred_fallthru
          _
        // Predicated region
        $region57: #{tpu_custom_call.1} parent=11 // pred_check
          %p374 = pneg %p300
        $region58: #{tpu_custom_call.1} parent=11 // pred_check_branch
          %376 = sbr.rel (%p374) target = $region60
        $region59: #{tpu_custom_call.1} parent=11 // pred_region
          _
        $region60: #{tpu_custom_call.1} parent=11 // pred_fallthru
          _
      $region12: #{tpu_custom_call.1} parent=5 // pred_fallthru
        _
      %p377 = scmp.lt.s32.totalorder %s22, 2
      // Predicated region
      $region61: #{tpu_custom_call.1} parent=5 // pred_check
        %p378 = pneg %p377
      $region62: #{tpu_custom_call.1} parent=5 // pred_check_branch
        %380 = sbr.rel (%p378) target = $region64
      $region63: #{tpu_custom_call.1} parent=5 // pred_region
        // Predicated region
        $region65: #{tpu_custom_call.1} parent=63 // pred_check
          %p381 = pneg %p42
        $region66: #{tpu_custom_call.1} parent=63 // pred_check_branch
          %383 = sbr.rel (%p381) target = $region68
        $region67: #{tpu_custom_call.1} parent=63 // pred_region
          %p384 = scmp.lt.s32.totalorder %s22, 1
          %s385 = scalar_select %p384, %s22, 1
          %s386 = smul.addr %s385, 8
          %s387 = scalar_lea.vmem %s0, %s386
        $region68: #{tpu_custom_call.1} parent=63 // pred_fallthru
          _
      $region64: #{tpu_custom_call.1} parent=5 // pred_fallthru
        _
      %p388 = scmp.le.s32.totalorder 1, %s22
      %p389 = scmp.lt.s32.totalorder %s22, 3
      %p390 = pnand %p388, %p389
      %p391 = pneg %p390
      // Predicated region
      $region69: #{tpu_custom_call.1} parent=5 // pred_check
        _
      $region70: #{tpu_custom_call.1} parent=5 // pred_check_branch
        %393 = sbr.rel (%p390) target = $region72
      $region71: #{tpu_custom_call.1} parent=5 // pred_region
        %s394 = ssub.s32 %s22, 1
        %p395 = scmp.lt.s32.totalorder %s27, 1
        %s396 = scalar_select %p395, %s27, 1
        %s397 = smul.addr %s396, 8
        %s398 = scalar_lea.vmem %s0, %s397
        %p399 = pneg %p48
        %p400 = pneg %p45
        %p401 = pneg %p69
        %p402 = pneg %p66
        %p403 = pneg %p90
        %p404 = pneg %p87
        %p405 = pneg %p111
        %p406 = pneg %p108
        %p407 = pneg %p132
        %p408 = pneg %p129
        %p409 = pneg %p153
        %p410 = pneg %p150
        %p411 = pneg %p174
        %p412 = pneg %p171
        %p413 = pneg %p195
        %p414 = pneg %p192
        %p415 = pneg %p216
        %p416 = pneg %p213
        %p417 = pneg %p237
        %p418 = pneg %p234
        %p419 = pneg %p258
        %p420 = pneg %p255
        %p421 = pneg %p279
        %p422 = pneg %p276
        %p423 = pneg %p300
        %p424 = pneg %p297
        %p425 = pneg %p326
        %p426 = pneg %p323
        %s427 = sand.u32 %s313, 1
        %s428 = scalar_lea.sflag [#allocation7], %s427
        %s429 = sand.u32 %s313, 1
        %s430 = smul.addr %s429, 8
        %s431 = scalar_lea.vmem [#allocation6], %s430
        %p432 = scmp.lt.s32.totalorder %s27, 1
        %s433 = scalar_select %p432, %s27, 1
        %s434 = smul.addr %s433, 8
        %s435 = scalar_lea.vmem %s0, %s434
        %v437 = vld [vmem:[%s435] sm:$0xff]
        %v438 = vld [vmem:[%s1] sm:$0x1]
        %v439 = vld [vmem:[%s2] sm:$0x1]
        %vm440 = vcmask 261120
        %v441 = vsel %vm440, %v437, 0.0
        %442 = vadd.xlane.f32.xlu0 %v441
        %v443 = vpop.xlane.xlu0 %442
        %v444 = vrcp.pop 32.0
        %v445 = vmul.f32 %v443, %v444
        %v446 = vsub.f32 %v437, %v445
        %v447 = vmul.f32 %v446, %v446
        %v448 = vsel %vm440, %v447, 0.0
        %449 = vadd.xlane.f32.xlu0 %v448
        %v450 = vpop.xlane.xlu0 %449
        %v451 = vmul.f32 %v450, %v444
        %v452 = vadd.f32 %v451, 1e-05
        %v453 = vrsqrt.pop %v452
        %v454 = vmul.f32 %v446, %v453
        %v456 = vlaneseq
        %v457 = vshrl.u32 %v456, 7
        %v458 = vsub.s32 0, %v457
        %v459 = vrot.slane %v438, %v458
        %v461 = vmul.f32 %v454, %v459
        %v463 = vlaneseq
        %v464 = vshrl.u32 %v463, 7
        %v465 = vsub.s32 0, %v464
        %v466 = vrot.slane %v439, %v465
        %v468 = vadd.f32 %v461, %v466
        %v469 = vpack.c.bf16 %v468, %v468
        %v470 = vld [vmem:[%s3] sm:$0xf]
        %v471 = vld [vmem:[%s3 + $0x4] sm:$0xf]
        %v472 = vld [vmem:[%s3 + $0x8] sm:$0xf]
        %v473 = vld [vmem:[%s3 + $0xc] sm:$0xf]
        %v474 = vld [vmem:[%s4] sm:$0x1]
        %v476 = vlaneseq
        %v477 = vshrl.u32 %v476, 7
        %v478 = vsub.s32 0, %v477
        %v479 = vrot.slane %v474, %v478
        %v485 = vunpack.c.l.b16 %v470
        %v486 = vunpack.c.l.b16 %v471
        %v487 = vunpack.c.l.b16 %v472
        %v488 = vunpack.c.l.b16 %v473
        %v489 = vpack.c.b16 %v486, %v485
        %v490 = vpack.c.b16 %v488, %v487
        %v494 = vsel %vm440, %v469, 0
        %496 = vmatprep.subr.bf16.mxu0 0
        %497 = vmatpush1.bf16.msra.mxu0 %v489
        %498 = vmatprep.subr.bf16.mxu0 0
        %499 = vmatpush1.bf16.msra.mxu0 %v490
        %500 = vmatprep.subr.bf16.mxu0 0
        %501 = vmatpush1.bf16.msra.mxu0 0
        %502 = vmatprep.subr.bf16.mxu0 0
        %503 = vmatpush1.bf16.msra.mxu0 0
        %504 = vmatprep.subr.bf16.mxu0 0
        %505 = vmatpush1.bf16.msra.mxu0 0
        %506 = vmatprep.subr.bf16.mxu0 0
        %507 = vmatpush1.bf16.msra.mxu0 0
        %508 = vmatprep.subr.bf16.mxu0 0
        %509 = vmatpush1.bf16.msra.mxu0 0
        %510 = vmatprep.subr.bf16.mxu0 0
        %511 = vmatpush1.bf16.msra.mxu0 0
        %512 = vmatprep.subr.bf16.mxu0 0
        %513 = vmatpush1.bf16.msra.mxu0 0
        %514 = vmatprep.subr.bf16.mxu0 0
        %515 = vmatpush1.bf16.msra.mxu0 0
        %516 = vmatprep.subr.bf16.mxu0 0
        %517 = vmatpush1.bf16.msra.mxu0 0
        %518 = vmatprep.subr.bf16.mxu0 0
        %519 = vmatpush1.bf16.msra.mxu0 0
        %520 = vmatprep.subr.bf16.mxu0 0
        %521 = vmatpush1.bf16.msra.mxu0 0
        %522 = vmatprep.subr.bf16.mxu0 0
        %523 = vmatpush1.bf16.msra.mxu0 0
        %524 = vmatprep.subr.bf16.mxu0 0
        %525 = vmatpush1.bf16.msra.mxu0 0
        %526 = vmatprep.subr.bf16.mxu0 0
        %527 = vmatpush1.bf16.msra.mxu0 0
        %528 = vmatprep.mubr.bf16.mxu0 0
        %529 = vmatmul.mubr.bf16.gmra.mrb[0].mxu0 %v494
        %v530 = vpop.f32.mrb[0].mxu0
        %v531 = vadd.f32 %v479, %v530
        %v532 = vpop.f32.mrb[0].mxu0
        %v533 = vpop.f32.mrb[0].mxu0
        %v534 = vpop.f32.mrb[0].mxu0
        %535 = vdwg.mxu0
        %v536 = vpack.c.bf16 %v531, %v531
        %vm537 = vcmask 60416
        %538 = vst.msk [vmem:[#allocation2] sm:$0xf] %vm537, %v536
        %v540 = vunpack.c.l.b16 %v536
        %v541 = vpack.c.b16 %v540, %v540
        %542 = vrot.lane.b32.xlu0 %v541, 96
        %v543 = vpop.permute.xlu0 %542
        %545 = vst.msk [vmem:[#allocation3] sm:$0xf] %vm537, %v543
        %546 = vrot.lane.b32.xlu0 %v541, 64
        %v547 = vpop.permute.xlu0 %546
        %549 = vst.msk [vmem:[#allocation4] sm:$0xf] %vm537, %v547
        %550 = vrot.lane.b32.xlu0 %v541, 120
        %v551 = vpop.permute.xlu0 %550
        %s553 = scalar_lea.vmem [#allocation2], 4
        %554 = vst.msk [vmem:[%s553] sm:$0xf] %vm537, %v551
        %555 = vrot.lane.b32.xlu0 %v541, 88
        %v556 = vpop.permute.xlu0 %555
        %s558 = scalar_lea.vmem [#allocation3], 4
        %559 = vst.msk [vmem:[%s558] sm:$0xf] %vm537, %v556
        %560 = vrot.lane.b32.xlu0 %v541, 56
        %v561 = vpop.permute.xlu0 %560
        %s563 = scalar_lea.vmem [#allocation4], 4
        %564 = vst.msk [vmem:[%s563] sm:$0xf] %vm537, %v561
        %565 = vrot.lane.b32.xlu0 %v541, 112
        %v566 = vpop.permute.xlu0 %565
        %s568 = scalar_lea.vmem [#allocation2], 8
        %569 = vst.msk [vmem:[%s568] sm:$0xf] %vm537, %v566
        %570 = vrot.lane.b32.xlu0 %v541, 80
        %v571 = vpop.permute.xlu0 %570
        %s573 = scalar_lea.vmem [#allocation3], 8
        %574 = vst.msk [vmem:[%s573] sm:$0xf] %vm537, %v571
        %575 = vrot.lane.b32.xlu0 %v541, 48
        %v576 = vpop.permute.xlu0 %575
        %s578 = scalar_lea.vmem [#allocation4], 8
        %579 = vst.msk [vmem:[%s578] sm:$0xf] %vm537, %v576
        %580 = vrot.lane.b32.xlu0 %v541, 104
        %v581 = vpop.permute.xlu0 %580
        %s583 = scalar_lea.vmem [#allocation2], 12
        %584 = vst.msk [vmem:[%s583] sm:$0xf] %vm537, %v581
        %585 = vrot.lane.b32.xlu0 %v541, 72
        %v586 = vpop.permute.xlu0 %585
        %s588 = scalar_lea.vmem [#allocation3], 12
        %589 = vst.msk [vmem:[%s588] sm:$0xf] %vm537, %v586
        %590 = vrot.lane.b32.xlu0 %v541, 40
        %v591 = vpop.permute.xlu0 %590
        %s593 = scalar_lea.vmem [#allocation4], 12
        %594 = vst.msk [vmem:[%s593] sm:$0xf] %vm537, %v591
        loop: start=0, step=1, limit=4
        $region73: #{tpu_custom_call.1} parent=71 // loop_pre_header
          _
        $region74: #{tpu_custom_call.1} parent=71 // loop_header
          %s596 = sphi 0, %s600
          %p597 = scmp.ge.s32.totalorder %s596, 4
        $region75: #{tpu_custom_call.1} parent=71 // loop_header_branch
          %599 = sbr.rel (%p597) target = $region79
        $region76: #{tpu_custom_call.1} parent=71 // loop_body
          %s601 = smul.addr %s596, 4
          %s602 = scalar_lea.vmem [#allocation2], %s601
          %v603 = vld [vmem:[%s602] sm:$0xf]
          %s604 = smul.addr %s596, 4
          %s605 = scalar_lea.vmem [#allocation3], %s604
          %v606 = vld [vmem:[%s605] sm:$0xf]
          %s607 = smul.addr %s596, 4
          %s608 = scalar_lea.vmem [#allocation4], %s607
          %v609 = vld [vmem:[%s608] sm:$0xf]
          %vm610 = vcmask 64512
          %v612 = vsel %vm610, %v603, 0
          %v615 = vsel %vm610, %v606, 0
          %617 = vmatprep.subr.bf16.mxu0 0
          %618 = vmatpush1.bf16.xpose.msra.mxu0 %v615
          %619 = vmatprep.subr.bf16.mxu0 0
          %620 = vmatpush1.bf16.xpose.msra.mxu0 0
          %621 = vmatprep.subr.bf16.mxu0 0
          %622 = vmatpush1.bf16.xpose.msra.mxu0 0
          %623 = vmatprep.subr.bf16.mxu0 0
          %624 = vmatpush1.bf16.xpose.msra.mxu0 0
          %625 = vmatprep.subr.bf16.mxu0 0
          %626 = vmatpush1.bf16.xpose.msra.mxu0 0
          %627 = vmatprep.subr.bf16.mxu0 0
          %628 = vmatpush1.bf16.xpose.msra.mxu0 0
          %629 = vmatprep.subr.bf16.mxu0 0
          %630 = vmatpush1.bf16.xpose.msra.mxu0 0
          %631 = vmatprep.subr.bf16.mxu0 0
          %632 = vmatpush1.bf16.xpose.msra.mxu0 0
          %633 = vmatprep.subr.bf16.mxu0 0
          %634 = vmatpush1.bf16.xpose.msra.mxu0 0
          %635 = vmatprep.subr.bf16.mxu0 0
          %636 = vmatpush1.bf16.xpose.msra.mxu0 0
          %637 = vmatprep.subr.bf16.mxu0 0
          %638 = vmatpush1.bf16.xpose.msra.mxu0 0
          %639 = vmatprep.subr.bf16.mxu0 0
          %640 = vmatpush1.bf16.xpose.msra.mxu0 0
          %641 = vmatprep.subr.bf16.mxu0 0
          %642 = vmatpush1.bf16.xpose.msra.mxu0 0
          %643 = vmatprep.subr.bf16.mxu0 0
          %644 = vmatpush1.bf16.xpose.msra.mxu0 0
          %645 = vmatprep.subr.bf16.mxu0 0
          %646 = vmatpush1.bf16.xpose.msra.mxu0 0
          %647 = vmatprep.subr.bf16.mxu0 0
          %648 = vmatpush1.bf16.xpose.msra.mxu0 0
          %649 = vmatprep.mubr.bf16.mxu0 0
          %650 = vmatmul.mubr.bf16.gmra.mrb[0].mxu0 %v612
          %v651 = vpop.f32.mrb[0].mxu0
          %v652 = vadd.f32 0.0, %v651
          %v653 = vpop.f32.mrb[0].mxu0
          %v654 = vpop.f32.mrb[0].mxu0
          %v655 = vpop.f32.mrb[0].mxu0
          %656 = vdwg.mxu0
          %v657 = vsel %vm610, %v652, -inf
          %658 = vmax.xlane.f32.xlu0 %v657
          %v659 = vpop.xlane.xlu0 %658
          %v660 = vsub.f32 %v652, %v659
          %v661 = vmul.f32 %v660, 1.442695
          %v662 = vpow.pop %v661
          %v663 = vsel %vm610, %v662, 0.0
          %664 = vadd.xlane.f32.xlu0 %v663
          %v665 = vpop.xlane.xlu0 %664
          %v666 = vpack.c.bf16 %v662, %v662
          %v668 = vsel %vm610, %v666, 0
          %vm670 = vcmask 1043456
          %v672 = vsel %vm670, %v609, 0
          %674 = vmatprep.subr.bf16.mxu0 0
          %675 = vmatpush1.bf16.msra.mxu0 %v672
          %676 = vmatprep.subr.bf16.mxu0 0
          %677 = vmatpush1.bf16.msra.mxu0 0
          %678 = vmatprep.subr.bf16.mxu0 0
          %679 = vmatpush1.bf16.msra.mxu0 0
          %680 = vmatprep.subr.bf16.mxu0 0
          %681 = vmatpush1.bf16.msra.mxu0 0
          %682 = vmatprep.subr.bf16.mxu0 0
          %683 = vmatpush1.bf16.msra.mxu0 0
          %684 = vmatprep.subr.bf16.mxu0 0
          %685 = vmatpush1.bf16.msra.mxu0 0
          %686 = vmatprep.subr.bf16.mxu0 0
          %687 = vmatpush1.bf16.msra.mxu0 0
          %688 = vmatprep.subr.bf16.mxu0 0
          %689 = vmatpush1.bf16.msra.mxu0 0
          %690 = vmatprep.subr.bf16.mxu0 0
          %691 = vmatpush1.bf16.msra.mxu0 0
          %692 = vmatprep.subr.bf16.mxu0 0
          %693 = vmatpush1.bf16.msra.mxu0 0
          %694 = vmatprep.subr.bf16.mxu0 0
          %695 = vmatpush1.bf16.msra.mxu0 0
          %696 = vmatprep.subr.bf16.mxu0 0
          %697 = vmatpush1.bf16.msra.mxu0 0
          %698 = vmatprep.subr.bf16.mxu0 0
          %699 = vmatpush1.bf16.msra.mxu0 0
          %700 = vmatprep.subr.bf16.mxu0 0
          %701 = vmatpush1.bf16.msra.mxu0 0
          %702 = vmatprep.subr.bf16.mxu0 0
          %703 = vmatpush1.bf16.msra.mxu0 0
          %704 = vmatprep.subr.bf16.mxu0 0
          %705 = vmatpush1.bf16.msra.mxu0 0
          %706 = vmatprep.mubr.bf16.mxu0 0
          %707 = vmatmul.mubr.bf16.gmra.mrb[0].mxu0 %v668
          %v708 = vpop.f32.mrb[0].mxu0
          %v709 = vadd.f32 0.0, %v708
          %v710 = vpop.f32.mrb[0].mxu0
          %v711 = vpop.f32.mrb[0].mxu0
          %v712 = vpop.f32.mrb[0].mxu0
          %713 = vdwg.mxu0
          %v714 = vrcp.pop %v665
          %v715 = vmul.f32 %v709, %v714
          %v716 = vpack.c.bf16 %v715, %v715
          %s717 = smul.addr %s596, 4
          %s718 = scalar_lea.vmem [#allocation5], %s717
          %719 = vst.msk [vmem:[%s718] sm:$0xf] %vm537, %v716
        $region77: #{tpu_custom_call.1} parent=71 // loop_footer
          %s600 = sadd.s32 1, %s596
        $region78: #{tpu_custom_call.1} parent=71 // loop_footer_branch
          %595 = sbr.rel target = $region74
        $region79: #{tpu_custom_call.1} parent=71 // loop_exit
          _
        %v720 = vld [vmem:[#allocation5] sm:$0xf]
        %s721 = scalar_lea.vmem [#allocation5], 4
        %v722 = vld [vmem:[%s721] sm:$0xf]
        %s723 = scalar_lea.vmem [#allocation5], 8
        %v724 = vld [vmem:[%s723] sm:$0xf]
        %s725 = scalar_lea.vmem [#allocation5], 12
        %v726 = vld [vmem:[%s725] sm:$0xf]
        %v728 = vunpack.c.l.b16 %v722
        %v729 = vpack.c.b16 %v728, %v728
        %730 = vrot.lane.b32.xlu0 %v729, 8
        %v731 = vpop.permute.xlu0 %730
        %v733 = vunpack.c.l.b16 %v724
        %v734 = vpack.c.b16 %v733, %v733
        %735 = vrot.lane.b32.xlu0 %v734, 16
        %v736 = vpop.permute.xlu0 %735
        %v738 = vunpack.c.l.b16 %v726
        %v739 = vpack.c.b16 %v738, %v738
        %740 = vrot.lane.b32.xlu0 %v739, 24
        %v741 = vpop.permute.xlu0 %740
        %vm742 = vcmask 64512
        %v745 = vsel %vm742, %v720, %v731
        %vm746 = vcmask 130048
        %v748 = vsel %vm746, %v745, %v736
        %vm749 = vcmask 195584
        %v751 = vsel %vm749, %v748, %v741
        %v752 = vld [vmem:[%s5] sm:$0xf]
        %v753 = vld [vmem:[%s5 + $0x4] sm:$0xf]
        %v754 = vld [vmem:[%s5 + $0x8] sm:$0xf]
        %v755 = vld [vmem:[%s5 + $0xc] sm:$0xf]
        %v756 = vld [vmem:[%s6] sm:$0x1]
        %v758 = vlaneseq
        %v759 = vshrl.u32 %v758, 7
        %v760 = vsub.s32 0, %v759
        %v761 = vrot.slane %v756, %v760
        %v767 = vunpack.c.l.b16 %v752
        %v768 = vunpack.c.l.b16 %v753
        %v769 = vunpack.c.l.b16 %v754
        %v770 = vunpack.c.l.b16 %v755
        %v771 = vpack.c.b16 %v768, %v767
        %v772 = vpack.c.b16 %v770, %v769
        %v775 = vsel %vm440, %v751, 0
        %777 = vmatprep.subr.bf16.mxu0 0
        %778 = vmatpush1.bf16.msra.mxu0 %v771
        %779 = vmatprep.subr.bf16.mxu0 0
        %780 = vmatpush1.bf16.msra.mxu0 %v772
        %781 = vmatprep.subr.bf16.mxu0 0
        %782 = vmatpush1.bf16.msra.mxu0 0
        %783 = vmatprep.subr.bf16.mxu0 0
        %784 = vmatpush1.bf16.msra.mxu0 0
        %785 = vmatprep.subr.bf16.mxu0 0
        %786 = vmatpush1.bf16.msra.mxu0 0
        %787 = vmatprep.subr.bf16.mxu0 0
        %788 = vmatpush1.bf16.msra.mxu0 0
        %789 = vmatprep.subr.bf16.mxu0 0
        %790 = vmatpush1.bf16.msra.mxu0 0
        %791 = vmatprep.subr.bf16.mxu0 0
        %792 = vmatpush1.bf16.msra.mxu0 0
        %793 = vmatprep.subr.bf16.mxu0 0
        %794 = vmatpush1.bf16.msra.mxu0 0
        %795 = vmatprep.subr.bf16.mxu0 0
        %796 = vmatpush1.bf16.msra.mxu0 0
        %797 = vmatprep.subr.bf16.mxu0 0
        %798 = vmatpush1.bf16.msra.mxu0 0
        %799 = vmatprep.subr.bf16.mxu0 0
        %800 = vmatpush1.bf16.msra.mxu0 0
        %801 = vmatprep.subr.bf16.mxu0 0
        %802 = vmatpush1.bf16.msra.mxu0 0
        %803 = vmatprep.subr.bf16.mxu0 0
        %804 = vmatpush1.bf16.msra.mxu0 0
        %805 = vmatprep.subr.bf16.mxu0 0
        %806 = vmatpush1.bf16.msra.mxu0 0
        %807 = vmatprep.subr.bf16.mxu0 0
        %808 = vmatpush1.bf16.msra.mxu0 0
        %809 = vmatprep.mubr.bf16.mxu0 0
        %810 = vmatmul.mubr.bf16.gmra.mrb[0].mxu0 %v775
        %v811 = vpop.f32.mrb[0].mxu0
        %v812 = vadd.f32 %v761, %v811
        %v813 = vpop.f32.mrb[0].mxu0
        %v814 = vpop.f32.mrb[0].mxu0
        %v815 = vpop.f32.mrb[0].mxu0
        %816 = vdwg.mxu0
        %v817 = vadd.f32 %v437, %v812
        %v818 = vld [vmem:[%s7] sm:$0x1]
        %v819 = vld [vmem:[%s8] sm:$0x1]
        %v820 = vsel %vm440, %v817, 0.0
        %821 = vadd.xlane.f32.xlu0 %v820
        %v822 = vpop.xlane.xlu0 %821
        %v823 = vmul.f32 %v822, %v444
        %v824 = vsub.f32 %v817, %v823
        %v825 = vmul.f32 %v824, %v824
        %v826 = vsel %vm440, %v825, 0.0
        %827 = vadd.xlane.f32.xlu0 %v826
        %v828 = vpop.xlane.xlu0 %827
        %v829 = vmul.f32 %v828, %v444
        %v830 = vadd.f32 %v829, 1e-05
        %v831 = vrsqrt.pop %v830
        %v832 = vmul.f32 %v824, %v831
        %v834 = vlaneseq
        %v835 = vshrl.u32 %v834, 7
        %v836 = vsub.s32 0, %v835
        %v837 = vrot.slane %v818, %v836
        %v839 = vmul.f32 %v832, %v837
        %v841 = vlaneseq
        %v842 = vshrl.u32 %v841, 7
        %v843 = vsub.s32 0, %v842
        %v844 = vrot.slane %v819, %v843
        %v846 = vadd.f32 %v839, %v844
        %v847 = vpack.c.bf16 %v846, %v846
        %v848 = vld [vmem:[%s9] sm:$0xf]
        %v849 = vld [vmem:[%s9 + $0x4] sm:$0xf]
        %v850 = vld [vmem:[%s9 + $0x8] sm:$0xf]
        %v851 = vld [vmem:[%s9 + $0xc] sm:$0xf]
        %v852 = vld [vmem:[%s10] sm:$0x1]
        %v854 = vlaneseq
        %v855 = vshrl.u32 %v854, 7
        %v856 = vsub.s32 0, %v855
        %v857 = vrot.slane %v852, %v856
        %v863 = vunpack.c.l.b16 %v848
        %v864 = vunpack.c.l.b16 %v849
        %v865 = vunpack.c.l.b16 %v850
        %v866 = vunpack.c.l.b16 %v851
        %v867 = vpack.c.b16 %v864, %v863
        %v868 = vpack.c.b16 %v866, %v865
        %v872 = vsel %vm440, %v847, 0
        %874 = vmatprep.subr.bf16.mxu0 0
        %875 = vmatpush1.bf16.msra.mxu0 %v867
        %876 = vmatprep.subr.bf16.mxu0 0
        %877 = vmatpush1.bf16.msra.mxu0 %v868
        %878 = vmatprep.subr.bf16.mxu0 0
        %879 = vmatpush1.bf16.msra.mxu0 0
        %880 = vmatprep.subr.bf16.mxu0 0
        %881 = vmatpush1.bf16.msra.mxu0 0
        %882 = vmatprep.subr.bf16.mxu0 0
        %883 = vmatpush1.bf16.msra.mxu0 0
        %884 = vmatprep.subr.bf16.mxu0 0
        %885 = vmatpush1.bf16.msra.mxu0 0
        %886 = vmatprep.subr.bf16.mxu0 0
        %887 = vmatpush1.bf16.msra.mxu0 0
        %888 = vmatprep.subr.bf16.mxu0 0
        %889 = vmatpush1.bf16.msra.mxu0 0
        %890 = vmatprep.subr.bf16.mxu0 0
        %891 = vmatpush1.bf16.msra.mxu0 0
        %892 = vmatprep.subr.bf16.mxu0 0
        %893 = vmatpush1.bf16.msra.mxu0 0
        %894 = vmatprep.subr.bf16.mxu0 0
        %895 = vmatpush1.bf16.msra.mxu0 0
        %896 = vmatprep.subr.bf16.mxu0 0
        %897 = vmatpush1.bf16.msra.mxu0 0
        %898 = vmatprep.subr.bf16.mxu0 0
        %899 = vmatpush1.bf16.msra.mxu0 0
        %900 = vmatprep.subr.bf16.mxu0 0
        %901 = vmatpush1.bf16.msra.mxu0 0
        %902 = vmatprep.subr.bf16.mxu0 0
        %903 = vmatpush1.bf16.msra.mxu0 0
        %904 = vmatprep.subr.bf16.mxu0 0
        %905 = vmatpush1.bf16.msra.mxu0 0
        %906 = vmatprep.mubr.bf16.mxu0 0
        %907 = vmatmul.mubr.bf16.gmra.mrb[0].mxu0 %v872
        %v908 = vpop.f32.mrb[0].mxu0
        %v909 = vadd.f32 %v857, %v908
        %v910 = vpop.f32.mrb[0].mxu0
        %v911 = vpop.f32.mrb[0].mxu0
        %v912 = vpop.f32.mrb[0].mxu0
        %913 = vdwg.mxu0
        %v914 = vmul.f32 %v909, 0.5
        %v915 = vmul.f32 %v909, 0.044715
        %v916 = vmul.f32 %v915, %v909
        %v917 = vmul.f32 %v916, %v909
        %v918 = vadd.f32 %v909, %v917
        %v919 = vmul.f32 %v918, 0.7978846
        %v920 = vtanh.pop %v919
        %v921 = vadd.f32 %v920, 1.0
        %v922 = vmul.f32 %v914, %v921
        %v923 = vpack.c.bf16 %v922, %v922
        %v924 = vld [vmem:[%s11] sm:$0xf]
        %v925 = vld [vmem:[%s11 + $0x4] sm:$0xf]
        %v926 = vld [vmem:[%s11 + $0x8] sm:$0xf]
        %v927 = vld [vmem:[%s11 + $0xc] sm:$0xf]
        %v928 = vld [vmem:[%s11 + $0x10] sm:$0xf]
        %v929 = vld [vmem:[%s11 + $0x14] sm:$0xf]
        %v930 = vld [vmem:[%s11 + $0x18] sm:$0xf]
        %v931 = vld [vmem:[%s11 + $0x1c] sm:$0xf]
        %v932 = vld [vmem:[%s11 + $0x20] sm:$0xf]
        %v933 = vld [vmem:[%s11 + $0x24] sm:$0xf]
        %v934 = vld [vmem:[%s11 + $0x28] sm:$0xf]
        %v935 = vld [vmem:[%s11 + $0x2c] sm:$0xf]
        %v936 = vld [vmem:[%s11 + $0x30] sm:$0xf]
        %v937 = vld [vmem:[%s11 + $0x34] sm:$0xf]
        %v938 = vld [vmem:[%s11 + $0x38] sm:$0xf]
        %v939 = vld [vmem:[%s11 + $0x3c] sm:$0xf]
        %v940 = vld [vmem:[%s12] sm:$0x1]
        %v942 = vlaneseq
        %v943 = vshrl.u32 %v942, 7
        %v944 = vsub.s32 0, %v943
        %v945 = vrot.slane %v940, %v944
        %v963 = vunpack.c.l.b16 %v924
        %v964 = vunpack.c.l.b16 %v925
        %v965 = vunpack.c.l.b16 %v926
        %v966 = vunpack.c.l.b16 %v927
        %v967 = vunpack.c.l.b16 %v928
        %v968 = vunpack.c.l.b16 %v929
        %v969 = vunpack.c.l.b16 %v930
        %v970 = vunpack.c.l.b16 %v931
        %v971 = vunpack.c.l.b16 %v932
        %v972 = vunpack.c.l.b16 %v933
        %v973 = vunpack.c.l.b16 %v934
        %v974 = vunpack.c.l.b16 %v935
        %v975 = vunpack.c.l.b16 %v936
        %v976 = vunpack.c.l.b16 %v937
        %v977 = vunpack.c.l.b16 %v938
        %v978 = vunpack.c.l.b16 %v939
        %v979 = vpack.c.b16 %v964, %v963
        %v980 = vpack.c.b16 %v966, %v965
        %v981 = vpack.c.b16 %v968, %v967
        %v982 = vpack.c.b16 %v970, %v969
        %v983 = vpack.c.b16 %v972, %v971
        %v984 = vpack.c.b16 %v974, %v973
        %v985 = vpack.c.b16 %v976, %v975
        %v986 = vpack.c.b16 %v978, %v977
        %995 = vmatprep.subr.bf16.mxu0 0
        %996 = vmatpush1.bf16.msra.mxu0 %v979
        %997 = vmatprep.subr.bf16.mxu0 0
        %998 = vmatpush1.bf16.msra.mxu0 %v980
        %999 = vmatprep.subr.bf16.mxu0 0
        %1000 = vmatpush1.bf16.msra.mxu0 %v981
        %1001 = vmatprep.subr.bf16.mxu0 0
        %1002 = vmatpush1.bf16.msra.mxu0 %v982
        %1003 = vmatprep.subr.bf16.mxu0 0
        %1004 = vmatpush1.bf16.msra.mxu0 %v983
        %1005 = vmatprep.subr.bf16.mxu0 0
        %1006 = vmatpush1.bf16.msra.mxu0 %v984
        %1007 = vmatprep.subr.bf16.mxu0 0
        %1008 = vmatpush1.bf16.msra.mxu0 %v985
        %1009 = vmatprep.subr.bf16.mxu0 0
        %1010 = vmatpush1.bf16.msra.mxu0 %v986
        %1011 = vmatprep.subr.bf16.mxu0 0
        %1012 = vmatpush1.bf16.msra.mxu0 0
        %1013 = vmatprep.subr.bf16.mxu0 0
        %1014 = vmatpush1.bf16.msra.mxu0 0
        %1015 = vmatprep.subr.bf16.mxu0 0
        %1016 = vmatpush1.bf16.msra.mxu0 0
        %1017 = vmatprep.subr.bf16.mxu0 0
        %1018 = vmatpush1.bf16.msra.mxu0 0
        %1019 = vmatprep.subr.bf16.mxu0 0
        %1020 = vmatpush1.bf16.msra.mxu0 0
        %1021 = vmatprep.subr.bf16.mxu0 0
        %1022 = vmatpush1.bf16.msra.mxu0 0
        %1023 = vmatprep.subr.bf16.mxu0 0
        %1024 = vmatpush1.bf16.msra.mxu0 0
        %1025 = vmatprep.subr.bf16.mxu0 0
        %1026 = vmatpush1.bf16.msra.mxu0 0
        %1027 = vmatprep.mubr.bf16.mxu0 0
        %1028 = vmatmul.mubr.bf16.gmra.mrb[0].mxu0 %v923
        %v1029 = vpop.f32.mrb[0].mxu0
        %v1030 = vadd.f32 %v945, %v1029
        %v1031 = vpop.f32.mrb[0].mxu0
        %v1032 = vpop.f32.mrb[0].mxu0
        %v1033 = vpop.f32.mrb[0].mxu0
        %1034 = vdwg.mxu0
        %v1035 = vadd.f32 %v817, %v1030
        %1036 = vst.msk [vmem:[%s431] sm:$0xff] %vm440, %v1035
        %s1037 = sand.u32 %s313, 1
        %s1038 = scalar_lea.sflag [#allocation7], %s1037
        %s1039 = sand.u32 %s313, 1
        %s1040 = smul.addr %s1039, 8
        %s1041 = scalar_lea.vmem [#allocation6], %s1040
        // Predicated region
        $region80: #{tpu_custom_call.1} parent=71 // pred_check
          %p1042 = pneg %p323
        $region81: #{tpu_custom_call.1} parent=71 // pred_check_branch
          %1044 = sbr.rel (%p1042) target = $region83
        $region82: #{tpu_custom_call.1} parent=71 // pred_region
          %s1046 = ssub.s32 128, 128
          %1047 = vsyncadd %s1038, %s1046
          %s1048 = smul.addr %s27, 128
          %s1049 = scalar_lea.hbm %s13, %s1048
          %s1051 = sshll.u32 %s1041, 4
          %s1052 = int_to_ptr.vmem [resolvable:$true] %s1051
          %1054 = dma.vmem_to_hbm [thread:$0]  %s1052, 128, %s1049, %s1038
        $region83: #{tpu_custom_call.1} parent=71 // pred_fallthru
          _
      $region72: #{tpu_custom_call.1} parent=5 // pred_fallthru
        _
      %p1055 = scmp.le.s32.totalorder 2, %s22
      // Predicated region
      $region84: #{tpu_custom_call.1} parent=5 // pred_check
        %p1056 = pneg %p1055
      $region85: #{tpu_custom_call.1} parent=5 // pred_check_branch
        %1058 = sbr.rel (%p1056) target = $region87
      $region86: #{tpu_custom_call.1} parent=5 // pred_region
        %s1059 = ssub.s32 %s22, 2
        // Predicated region
        $region88: #{tpu_custom_call.1} parent=86 // pred_check
          %p1060 = pneg %p329
        $region89: #{tpu_custom_call.1} parent=86 // pred_check_branch
          %1062 = sbr.rel (%p1060) target = $region91
        $region90: #{tpu_custom_call.1} parent=86 // pred_region
          %s1063 = sand.u32 %s314, 1
          %s1064 = scalar_lea.sflag [#allocation7], %s1063
          %s1065 = sand.u32 %s314, 1
          %s1066 = smul.addr %s1065, 8
          %s1067 = scalar_lea.vmem [#allocation6], %s1066
          %1068 = dma.done %s1064, 128
        $region91: #{tpu_custom_call.1} parent=86 // pred_fallthru
          _
      $region87: #{tpu_custom_call.1} parent=5 // pred_fallthru
        _
    $region6: #{tpu_custom_call.1} parent=1 // loop_footer
      %s26 = sadd.s32 1, %s22
    $region7: #{tpu_custom_call.1} parent=1 // loop_footer_branch
      %21 = sbr.rel target = $region3
    $region8: #{tpu_custom_call.1} parent=1 // loop_exit
      _
    %1069 = vsyncpa [#allocation7], 1
    %s1070 = scalar_lea.sflag [#allocation7], 1
    %1071 = vsyncpa %s1070, 1

</llo_original>
